<compile_context>
chip_gen: v5e
topology: v5e:2x2
jax: 0.10.0
libtpu: 0.0.40
codegen_flags: <defaults>
</compile_context>

<pallas_src>
import functools

import jax
import jax.numpy as jnp
import numpy as np
from jax import lax
from jax.experimental import pallas as pl
from jax.experimental.pallas import tpu as pltpu

_BF16 = jnp.bfloat16
_F32 = jnp.float32

# Set True on hardware to use the EUP approximate reciprocal (softmax denominator +
# erf polynomial divide).  Kept False here so the pure-JAX reference check can use a
# tight tolerance (approx reciprocal perturbs bf16 roundings downstream).
USE_APPROX_RECIPROCAL = False


def _recip(x):
    # Only called inside Pallas kernels.
    if USE_APPROX_RECIPROCAL:
        return pl.reciprocal(x, approx=True)
    return 1.0 / x


# ---------------------------------------------------------------------------
# Shared math (used by both the kernel and the pure-JAX reference -> identical
# formulas, no structural numeric divergence).
# ---------------------------------------------------------------------------
def _ln(x, g, b, eps=1e-5):
    """LayerNorm over the last axis (matches nn.LayerNorm(dim), eps=1e-5)."""
    mu = jnp.mean(x, axis=-1, keepdims=True)
    var = jnp.mean((x - mu) ** 2, axis=-1, keepdims=True)
    return (x - mu) * lax.rsqrt(var + eps) * g + b


def _erf(x, recip=lambda v: 1.0 / v):
    # Abramowitz & Stegun 7.1.26 (|err| < 1.5e-7); only Mosaic-friendly ops.
    a1, a2, a3, a4, a5 = 0.254829592, -0.284496736, 1.421413741, -1.453152027, 1.061405429
    p = 0.3275911
    sign = jnp.where(x >= 0.0, 1.0, -1.0)
    ax = jnp.abs(x)
    t = recip(1.0 + p * ax)          # kernel: optional EUP reciprocal (widest tensor)
    poly = ((((a5 * t + a4) * t + a3) * t + a2) * t + a1) * t
    return sign * (1.0 - poly * jnp.exp(-ax * ax))


def _gelu_erf(x, recip=lambda v: 1.0 / v):
    # torch.nn.GELU() default (erf-based).
    return 0.5 * x * (1.0 + _erf(x * 0.7071067811865476, recip))


# ---------------------------------------------------------------------------
# Pallas kernels
# ---------------------------------------------------------------------------
def stacked_layers_kernel(x_ref, ln1_g, ln1_b, wqkv, wo, bo, ln2_g, ln2_b,
                          w1, b1, w2, b2, fin_g, fin_b, o_ref, resid,
                          *, heads, dim_head, block_b, seq):
    """One (batch-block, layer) grid step of the pre-norm Encoder stack.

    resid is a VMEM scratch holding the f32 residual stream (Bt*S, D); it persists
    across the 'arbitrary' layer axis, so activations never leave VMEM between layers.
    """
    l = pl.program_id(1)
    inner = heads * dim_head

    @pl.when(l == 0)
    def _():
        resid[...] = x_ref[...].reshape(resid.shape)

    x = resid[...]                                            # (Bt*S, D) f32

    # ---- pre-LN multi-head self-attention + residual ------------------------
    h = _ln(x, ln1_g[0], ln1_b[0]).astype(_BF16)
    # Fused QKV projection on the batch-flattened token axis (fills MXU rows).
    # 1/sqrt(dh) is folded into the q-columns of wqkv offline -> no logits scaling.
    qkv = jnp.dot(h, wqkv[0], preferred_element_type=_F32).astype(_BF16)  # (Bt*S, 3*inner)
    q = qkv[:, :inner]
    k = qkv[:, inner:2 * inner]
    v = qkv[:, 2 * inner:]

    # Attention is per batch element; the (small, static) loop is over batch only.
    # Heads are a *batch dimension* of the dot_generals -- no per-head dh-wide lane
    # slices, no lane-concat.  (For dh < 128 a lane-padded head layout would further
    # densify these matmuls; omitted at these sizes.)
    outs = []
    for bi in range(block_b):
        sl = slice(bi * seq, (bi + 1) * seq)
        qh = jnp.swapaxes(q[sl].reshape(seq, heads, dim_head), 0, 1)   # (H, S, dh)
        kh = jnp.swapaxes(k[sl].reshape(seq, heads, dim_head), 0, 1)
        vh = jnp.swapaxes(v[sl].reshape(seq, heads, dim_head), 0, 1)
        logits = lax.dot_general(qh, kh, (((2,), (2,)), ((0,), (0,))),
                                 preferred_element_type=_F32)          # (H, S, S)
        m = jnp.max(logits, axis=-1, keepdims=True)
        p = jnp.exp(logits - m)
        attn = (p * _recip(jnp.sum(p, axis=-1, keepdims=True))).astype(_BF16)
        oh = lax.dot_general(attn, vh, (((2,), (1,)), ((0,), (0,))),
                             preferred_element_type=_F32)              # (H, S, dh)
        outs.append(jnp.swapaxes(oh, 0, 1).reshape(seq, inner))        # (S, inner)
    o = outs[0] if block_b == 1 else jnp.concatenate(outs, axis=0)     # (Bt*S, inner)

    attn_out = jnp.dot(o.astype(_BF16), wo[0], preferred_element_type=_F32) + bo[0]
    x = x + attn_out

    # ---- pre-LN feed-forward (Linear -> GELU(erf) -> Linear) + residual -----
    # TODO(synk): on v6e/v7x the GELU / softmax epilogues could run in bf16
    # (bf16 VPU/EUP); kept f32 so the same kernel is valid on v5e and matches the
    # reference tightly.
    h2 = _ln(x, ln2_g[0], ln2_b[0]).astype(_BF16)
    f = jnp.dot(h2, w1[0], preferred_element_type=_F32) + b1[0]
    f = _gelu_erf(f, _recip).astype(_BF16)
    f = jnp.dot(f, w2[0], preferred_element_type=_F32) + b2[0]
    x = x + f

    resid[...] = x

    @pl.when(l == pl.num_programs(1) - 1)
    def _():
        # TransformerWrapper.norm fused into the last layer step.
        o_ref[...] = _ln(x, fin_g[0], fin_b[0]).reshape(o_ref.shape)


def final_ln_kernel(x_ref, g_ref, b_ref, o_ref):
    # Only used for the degenerate depth == 0 case.
    o_ref[0] = _ln(x_ref[0], g_ref[0], b_ref[0])


# ---------------------------------------------------------------------------
# pallas_call wrappers
# ---------------------------------------------------------------------------
def _const_spec(shape):
    """BlockSpec whose block index is constant over the whole grid.

    Single-buffered (pl.Buffered(1)) when the API is available -- constant-index
    blocks are fetched once, so double-buffering them just wastes VMEM.
    """
    idx = lambda b, l, _n=len(shape): (0,) * _n
    try:
        return pl.BlockSpec(shape, idx, pipeline_mode=pl.Buffered(1))
    except Exception:
        return pl.BlockSpec(shape, idx)


def _vmem_limit_bytes(*, bt, seq, d_model, d_inner, d_ff, heads):
    """Generation-aware VMEM budget for the stacked-layer kernel."""
    bf2, f4 = 2, 4
    n = bt * seq
    # One layer's weight block (bf16 matmul weights + f32 LN affine / biases).
    w_layer = ((d_model * 3 * d_inner + d_inner * d_model
                + d_model * d_ff + d_ff * d_model) * bf2
               + (6 * d_model + d_ff) * f4)
    io_blocks = 2 * 2 * n * d_model * f4              # x + out blocks, double-buffered
    scratch = n * d_model * f4                        # residual carrier
    intermediates = (n * (3 * d_inner + d_ff + 2 * d_model) * (f4 + bf2)
                     + heads * seq * seq * (f4 + bf2))
    # Weights double-buffered across the layer axis (that *is* the l+1 prefetch).
    need = 2 * w_layer + io_blocks + scratch + intermediates + (4 << 20)
    try:
        cap = int(pltpu.get_tpu_info().vmem_capacity_bytes)
    except Exception:
        cap = 64 << 20                                # conservative fallback (v7x per-TC)
    ceiling = cap * 9 // 10
    if need > ceiling:
        # TODO(synk): stream wqkv/w1/w2 in K-tiles along an extra 'arbitrary' grid
        # axis with an f32 VMEM accumulator (required on v7x at production D).
        raise NotImplementedError(
            f"per-layer weights + activations (~{need >> 20} MiB) exceed usable VMEM "
            f"(~{ceiling >> 20} MiB); K-tiled weight streaming not implemented.")
    return int(min(max(need, 16 << 20), ceiling))


def transformer_stack(x, p, *, heads, dim_head, block_b=None):
    B, S, D = x.shape
    L = p["wqkv"].shape[0]
    inner = heads * dim_head
    d_ff = p["w1"].shape[-1]
    assert p["wqkv"].shape[-1] == 3 * inner

    if block_b is None:
        # Choose Bt so Bt*S >= 128 (MXU rows) when the batch allows it.
        divisors = [d for d in range(1, B + 1) if B % d == 0]
        fits = [d for d in divisors if d * S >= 128]
        block_b = min(fits) if fits else B
    assert B % block_b == 0

    kernel = functools.partial(stacked_layers_kernel, heads=heads,
                               dim_head=dim_head, block_b=block_b, seq=S)

    grid = (B // block_b, L)

    def wspec(shape):  # per-layer stacked operand: block index follows the layer axis
        return pl.BlockSpec((1,) + shape, lambda b, l: (l,) + (0,) * len(shape))

    in_specs = [
        pl.BlockSpec((block_b, S, D), lambda b, l: (b, 0, 0)),   # x (read at l == 0)
        wspec((1, D)), wspec((1, D)),                            # ln1 g, b
        wspec((D, 3 * inner)),                                   # wqkv (scale folded in)
        wspec((inner, D)), wspec((1, D)),                        # wo, bo
        wspec((1, D)), wspec((1, D)),                            # ln2 g, b
        wspec((D, d_ff)), wspec((1, d_ff)),                      # w1, b1
        wspec((d_ff, D)), wspec((1, D)),                         # w2, b2
        _const_spec((1, D)), _const_spec((1, D)),                # final LN g, b
    ]

    vmem_limit = _vmem_limit_bytes(bt=block_b, seq=S, d_model=D, d_inner=inner,
                                   d_ff=d_ff, heads=heads)

    return pl.pallas_call(
        kernel,
        out_shape=jax.ShapeDtypeStruct((B, S, D), x.dtype),
        grid=grid,
        in_specs=in_specs,
        out_specs=pl.BlockSpec((block_b, S, D), lambda b, l: (b, 0, 0)),
        scratch_shapes=[pltpu.VMEM((block_b * S, D), _F32)],
        compiler_params=pltpu.CompilerParams(
            # NOTE(v7x): with grid[0] == 1 only one TensorCore is used; raise B/Bt or
            # add a second parallel axis for 2-TC chips.
            dimension_semantics=("parallel", "arbitrary"),
            vmem_limit_bytes=vmem_limit),
    )(x, p["ln1_g"], p["ln1_b"], p["wqkv"], p["wo"], p["bo"],
      p["ln2_g"], p["ln2_b"], p["w1"], p["b1"], p["w2"], p["b2"],
      p["final_g"], p["final_b"])


def final_layer_norm(x, g, b):
    B, S, D = x.shape
    return pl.pallas_call(
        final_ln_kernel,
        out_shape=jax.ShapeDtypeStruct((B, S, D), x.dtype),
        grid=(B,),
        in_specs=[pl.BlockSpec((1, S, D), lambda i: (i, 0, 0)),
                  pl.BlockSpec((1, D), lambda i: (0, 0)),
                  pl.BlockSpec((1, D), lambda i: (0, 0))],
        out_specs=pl.BlockSpec((1, S, D), lambda i: (i, 0, 0)),
        compiler_params=pltpu.CompilerParams(dimension_semantics=("parallel",)),
    )(x, g, b)


# ---------------------------------------------------------------------------
# Parameter construction (synthetic, deterministic); per-layer weights stacked [L,...]
# ---------------------------------------------------------------------------
def init_params(key, *, vocab, max_seq_len, dim, depth, heads, dim_head, ffn_mult=4):
    inner = heads * dim_head
    d_ff = dim * ffn_mult
    ks = jax.random.split(key, 9)
    s = 0.02

    def wn(k, shape):
        return s * jax.random.normal(k, shape, _F32)

    # Fold the 1/sqrt(dh) softmax scale into the q-columns of wqkv (offline, before
    # the bf16 cast) -- mathematically identical to scaling the logits.
    wqkv = wn(ks[2], (depth, dim, 3 * inner))
    scale = jnp.concatenate([jnp.full((inner,), dim_head ** -0.5, _F32),
                             jnp.ones((2 * inner,), _F32)])
    wqkv = (wqkv * scale[None, None, :]).astype(_BF16)

    return {
        "tok_emb": wn(ks[0], (vocab, dim)),
        "pos_emb": wn(ks[1], (max_seq_len, dim)),
        "ln1_g": jnp.ones((depth, 1, dim), _F32),
        "ln1_b": jnp.zeros((depth, 1, dim), _F32),
        "wqkv": wqkv,                                           # bf16, no bias
        "wo": wn(ks[3], (depth, inner, dim)).astype(_BF16),
        "bo": wn(ks[4], (depth, 1, dim)),
        "ln2_g": jnp.ones((depth, 1, dim), _F32),
        "ln2_b": jnp.zeros((depth, 1, dim), _F32),
        "w1": wn(ks[5], (depth, dim, d_ff)).astype(_BF16),
        "b1": wn(ks[6], (depth, 1, d_ff)),
        "w2": wn(ks[7], (depth, d_ff, dim)).astype(_BF16),
        "b2": wn(ks[8], (depth, 1, dim)),
        "final_g": jnp.ones((1, dim), _F32),
        "final_b": jnp.zeros((1, dim), _F32),
    }


# ---------------------------------------------------------------------------
# Forward passes
# ---------------------------------------------------------------------------
def transformer_embedder_forward(tokens, params, *, heads, dim_head):
    # token + absolute positional embedding (gather = glue, plain JAX)
    x = params["tok_emb"][tokens] + params["pos_emb"][: tokens.shape[1]][None]
    if params["wqkv"].shape[0] == 0:
        return final_layer_norm(x, params["final_g"], params["final_b"])
    return transformer_stack(x, params, heads=heads, dim_head=dim_head)


def reference_forward(tokens, params, *, heads, dim_head):
    """Pure-JAX reference mirroring the kernel's bf16-matmul / f32-accumulate recipe."""
    x = params["tok_emb"][tokens] + params["pos_emb"][: tokens.shape[1]][None]
    B, S, D = x.shape
    H, dh = heads, dim_head
    inner = H * dh
    L = params["wqkv"].shape[0]
    xt = x.reshape(B * S, D)
    for l in range(L):
        h = _ln(xt, params["ln1_g"][l, 0], params["ln1_b"][l, 0]).astype(_BF16)
        qkv = jnp.dot(h, params["wqkv"][l], preferred_element_type=_F32).astype(_BF16)
        q = qkv[:, :inner].reshape(B, S, H, dh)
        k = qkv[:, inner:2 * inner].reshape(B, S, H, dh)
        v = qkv[:, 2 * inner:].reshape(B, S, H, dh)
        logits = jnp.einsum("bqhe,bkhe->bhqk", q, k, preferred_element_type=_F32)
        m = jnp.max(logits, axis=-1, keepdims=True)
        p = jnp.exp(logits - m)
        attn = (p * (1.0 / jnp.sum(p, axis=-1, keepdims=True))).astype(_BF16)
        o = jnp.einsum("bhqk,bkhe->bqhe", attn, v,
                       preferred_element_type=_F32).reshape(B * S, inner)
        xt = xt + (jnp.dot(o.astype(_BF16), params["wo"][l],
                           preferred_element_type=_F32) + params["bo"][l, 0])
        h2 = _ln(xt, params["ln2_g"][l, 0], params["ln2_b"][l, 0]).astype(_BF16)
        f = jnp.dot(h2, params["w1"][l], preferred_element_type=_F32) + params["b1"][l, 0]
        f = _gelu_erf(f).astype(_BF16)
        f = jnp.dot(f, params["w2"][l], preferred_element_type=_F32) + params["b2"][l, 0]
        xt = xt + f
    return _ln(xt, params["final_g"][0], params["final_b"][0]).reshape(B, S, D)


# ---------------------------------------------------------------------------
if __name__ == "__main__":
    # Small synthetic config for TransformerEmbedder(n_embed=32, n_layer=2):
    # batch=2, seq=8, max_seq_len=77 (default), heads=4, dim_head=8 (inner = n_embed).
    # Toy shapes are for correctness only (everything is sub-vreg at D=32 / S=8).
    B, S = 2, 8
    n_embed, n_layer = 32, 2
    max_seq_len = 77
    vocab = 100                    # synthetic vocab (module omits num_tokens)
    heads, dim_head = 4, 8

    key = jax.random.PRNGKey(0)
    k_tok, k_par = jax.random.split(key)
    tokens = jax.random.randint(k_tok, (B, S), 0, vocab, dtype=jnp.int32)
    params = init_params(k_par, vocab=vocab, max_seq_len=max_seq_len,
                         dim=n_embed, depth=n_layer, heads=heads, dim_head=dim_head)

    z = transformer_embedder_forward(tokens, params, heads=heads, dim_head=dim_head)
    z = jax.block_until_ready(z)

    z_ref = reference_forward(tokens, params, heads=heads, dim_head=dim_head)
    # Kernel and reference share the exact same formula sequence; remaining slack only
    # covers MXU-vs-XLA accumulation-order noise around the bf16 requantization points.
    np.testing.assert_allclose(np.asarray(z), np.asarray(z_ref), rtol=1e-2, atol=1e-3)
    assert z.shape == (B, S, n_embed) and z.dtype == jnp.float32

    print("KERNEL_OK")
</pallas_src>

<mosaic_0001>
module attributes {stable_mosaic.version = 11 : i64} {
  func.func @stacked_layers_kernel(%arg0: i32, %arg1: i32, %arg2: memref<2x8x32xf32, #tpu.memory_space<vmem>>, %arg3: memref<1x1x32xf32, #tpu.memory_space<vmem>>, %arg4: memref<1x1x32xf32, #tpu.memory_space<vmem>>, %arg5: memref<1x32x96xbf16, #tpu.memory_space<vmem>>, %arg6: memref<1x32x32xbf16, #tpu.memory_space<vmem>>, %arg7: memref<1x1x32xf32, #tpu.memory_space<vmem>>, %arg8: memref<1x1x32xf32, #tpu.memory_space<vmem>>, %arg9: memref<1x1x32xf32, #tpu.memory_space<vmem>>, %arg10: memref<1x32x128xbf16, #tpu.memory_space<vmem>>, %arg11: memref<1x1x128xf32, #tpu.memory_space<vmem>>, %arg12: memref<1x128x32xbf16, #tpu.memory_space<vmem>>, %arg13: memref<1x1x32xf32, #tpu.memory_space<vmem>>, %arg14: memref<1x32xf32, #tpu.memory_space<vmem>>, %arg15: memref<1x32xf32, #tpu.memory_space<vmem>>, %arg16: memref<2x8x32xf32, #tpu.memory_space<vmem>>, %arg17: memref<16x32xf32, #tpu.memory_space<vmem>>) attributes {dimension_semantics = [#tpu.dimension_semantics<parallel>, #tpu.dimension_semantics<arbitrary>], iteration_bounds = array<i64: 1, 2>, scalar_prefetch = 0 : i64, scratch_operands = 1 : i64, tpu.core_type = #tpu.core_type<tc>, window_params = [{transform_indices = @transform_0, window_bounds = array<i64: 2, 8, 32>}, {transform_indices = @transform_1, window_bounds = array<i64: 1, 1, 32>}, {transform_indices = @transform_2, window_bounds = array<i64: 1, 1, 32>}, {transform_indices = @transform_3, window_bounds = array<i64: 1, 32, 96>}, {transform_indices = @transform_4, window_bounds = array<i64: 1, 32, 32>}, {transform_indices = @transform_5, window_bounds = array<i64: 1, 1, 32>}, {transform_indices = @transform_6, window_bounds = array<i64: 1, 1, 32>}, {transform_indices = @transform_7, window_bounds = array<i64: 1, 1, 32>}, {transform_indices = @transform_8, window_bounds = array<i64: 1, 32, 128>}, {transform_indices = @transform_9, window_bounds = array<i64: 1, 1, 128>}, {transform_indices = @transform_10, window_bounds = array<i64: 1, 128, 32>}, {transform_indices = @transform_11, window_bounds = array<i64: 1, 1, 32>}, {pipeline_mode = #tpu.pipeline_mode<synchronous>, transform_indices = @transform_12, window_bounds = array<i64: 1, 32>}, {pipeline_mode = #tpu.pipeline_mode<synchronous>, transform_indices = @transform_13, window_bounds = array<i64: 1, 32>}, {transform_indices = @transform_14, window_bounds = array<i64: 2, 8, 32>}]} {
    %c0_i32 = arith.constant 0 : i32
    %0 = arith.cmpi eq, %arg1, %c0_i32 : i32
    %1 = arith.extui %0 : i1 to i32
    %c0_i32_0 = arith.constant 0 : i32
    %2 = arith.cmpi ne, %1, %c0_i32_0 : i32
    scf.if %2 {
      %c0_77 = arith.constant 0 : index
      %c0_78 = arith.constant 0 : index
      %c0_79 = arith.constant 0 : index
      %186 = vector.load %arg2[%c0_77, %c0_78, %c0_79] : memref<2x8x32xf32, #tpu.memory_space<vmem>>, vector<2x8x32xf32>
      %187 = vector.shape_cast %186 : vector<2x8x32xf32> to vector<16x32xf32>
      %c0_80 = arith.constant 0 : index
      %c0_81 = arith.constant 0 : index
      %188 = vector.load %arg17[%c0_80, %c0_81] : memref<16x32xf32, #tpu.memory_space<vmem>>, vector<16x32xf32>
      tpu.vector_store %arg17[%c0_80, %c0_81], %187 {strides = array<i32>} : memref<16x32xf32, #tpu.memory_space<vmem>>, vector<16x32xf32>,
    } else {
    }
    %c0 = arith.constant 0 : index
    %c0_1 = arith.constant 0 : index
    %3 = vector.load %arg17[%c0, %c0_1] : memref<16x32xf32, #tpu.memory_space<vmem>>, vector<16x32xf32>
    %c0_2 = arith.constant 0 : index
    %c0_3 = arith.constant 0 : index
    %c0_4 = arith.constant 0 : index
    %4 = vector.load %arg3[%c0_2, %c0_3, %c0_4] : memref<1x1x32xf32, #tpu.memory_space<vmem>>, vector<1x1x32xf32>
    %5 = vector.shape_cast %4 : vector<1x1x32xf32> to vector<1x32xf32>
    %c0_5 = arith.constant 0 : index
    %c0_6 = arith.constant 0 : index
    %c0_7 = arith.constant 0 : index
    %6 = vector.load %arg4[%c0_5, %c0_6, %c0_7] : memref<1x1x32xf32, #tpu.memory_space<vmem>>, vector<1x1x32xf32>
    %7 = vector.shape_cast %6 : vector<1x1x32xf32> to vector<1x32xf32>
    %cst = arith.constant dense<0.000000e+00> : vector<16xf32>
    %8 = vector.multi_reduction <add>, %3, %cst [1] : vector<16x32xf32> to vector<16xf32>
    %9 = vector.shape_cast %8 : vector<16xf32> to vector<16x1xf32>
    %cst_8 = arith.constant 3.200000e+01 : f32
    %10 = vector.broadcast %cst_8 : f32 to vector<16x1xf32>
    %11 = arith.divf %9, %10 : vector<16x1xf32>
    %12 = vector.broadcast %11 : vector<16x1xf32> to vector<16x32xf32>
    %13 = arith.subf %3, %12 : vector<16x32xf32>
    %14 = arith.mulf %13, %13 : vector<16x32xf32>
    %cst_9 = arith.constant dense<0.000000e+00> : vector<16xf32>
    %15 = vector.multi_reduction <add>, %14, %cst_9 [1] : vector<16x32xf32> to vector<16xf32>
    %16 = vector.shape_cast %15 : vector<16xf32> to vector<16x1xf32>
    %cst_10 = arith.constant 3.200000e+01 : f32
    %17 = vector.broadcast %cst_10 : f32 to vector<16x1xf32>
    %18 = arith.divf %16, %17 : vector<16x1xf32>
    %19 = vector.broadcast %11 : vector<16x1xf32> to vector<16x32xf32>
    %20 = arith.subf %3, %19 : vector<16x32xf32>
    %cst_11 = arith.constant 9.99999974E-6 : f32
    %21 = vector.broadcast %cst_11 : f32 to vector<16x1xf32>
    %22 = arith.addf %18, %21 : vector<16x1xf32>
    %23 = math.rsqrt %22 : vector<16x1xf32>
    %24 = vector.broadcast %23 : vector<16x1xf32> to vector<16x32xf32>
    %25 = arith.mulf %20, %24 : vector<16x32xf32>
    %26 = vector.broadcast %5 : vector<1x32xf32> to vector<16x32xf32>
    %27 = arith.mulf %25, %26 : vector<16x32xf32>
    %28 = vector.broadcast %7 : vector<1x32xf32> to vector<16x32xf32>
    %29 = arith.addf %27, %28 : vector<16x32xf32>
    %30 = arith.truncf %29 : vector<16x32xf32> to vector<16x32xbf16>
    %c0_12 = arith.constant 0 : index
    %c0_13 = arith.constant 0 : index
    %c0_14 = arith.constant 0 : index
    %31 = vector.load %arg5[%c0_12, %c0_13, %c0_14] : memref<1x32x96xbf16, #tpu.memory_space<vmem>>, vector<1x32x96xbf16>
    %32 = vector.shape_cast %31 : vector<1x32x96xbf16> to vector<32x96xbf16>
    %cst_15 = arith.constant dense<0.000000e+00> : vector<16x96xf32>
    %33 = tpu.matmul %30, %32, %cst_15 {dimension_numbers = #tpu.dot_dimension_numbers<[1], [0], [0], [1], [0, 0, 1, 1], [], []>} : vector<16x32xbf16>, vector<32x96xbf16>, vector<16x96xf32> -> vector<16x96xf32>
    %34 = arith.truncf %33 : vector<16x96xf32> to vector<16x96xbf16>
    %35 = vector.extract_strided_slice %34 {offsets = [0, 0], sizes = [16, 32], strides = [1, 1]} : vector<16x96xbf16> to vector<16x32xbf16>
    %36 = vector.extract_strided_slice %34 {offsets = [0, 32], sizes = [16, 32], strides = [1, 1]} : vector<16x96xbf16> to vector<16x32xbf16>
    %37 = vector.extract_strided_slice %34 {offsets = [0, 64], sizes = [16, 32], strides = [1, 1]} : vector<16x96xbf16> to vector<16x32xbf16>
    %38 = vector.extract_strided_slice %35 {offsets = [0, 0], sizes = [8, 32], strides = [1, 1]} : vector<16x32xbf16> to vector<8x32xbf16>
    %39 = vector.shape_cast %38 : vector<8x32xbf16> to vector<8x4x8xbf16>
    %40 = tpu.transpose %39, [1, 0, 2] : vector<8x4x8xbf16> -> vector<4x8x8xbf16>
    %41 = vector.extract_strided_slice %36 {offsets = [0, 0], sizes = [8, 32], strides = [1, 1]} : vector<16x32xbf16> to vector<8x32xbf16>
    %42 = vector.shape_cast %41 : vector<8x32xbf16> to vector<8x4x8xbf16>
    %43 = tpu.transpose %42, [1, 0, 2] : vector<8x4x8xbf16> -> vector<4x8x8xbf16>
    %44 = vector.extract_strided_slice %37 {offsets = [0, 0], sizes = [8, 32], strides = [1, 1]} : vector<16x32xbf16> to vector<8x32xbf16>
    %45 = vector.shape_cast %44 : vector<8x32xbf16> to vector<8x4x8xbf16>
    %46 = tpu.transpose %45, [1, 0, 2] : vector<8x4x8xbf16> -> vector<4x8x8xbf16>
    %cst_16 = arith.constant dense<0.000000e+00> : vector<4x8x8xf32>
    %47 = tpu.matmul %40, %43, %cst_16 {dimension_numbers = #tpu.dot_dimension_numbers<[2], [2], [1], [1], [0, 0, 0, 1, 1, 1], [0], [0]>} : vector<4x8x8xbf16>, vector<4x8x8xbf16>, vector<4x8x8xf32> -> vector<4x8x8xf32>
    %cst_17 = arith.constant dense<0xFF800000> : vector<4x8xf32>
    %48 = vector.multi_reduction <maximumf>, %47, %cst_17 [2] : vector<4x8x8xf32> to vector<4x8xf32>
    %49 = vector.shape_cast %48 : vector<4x8xf32> to vector<4x8x1xf32>
    %50 = vector.broadcast %49 : vector<4x8x1xf32> to vector<4x8x8xf32>
    %51 = arith.subf %47, %50 : vector<4x8x8xf32>
    %52 = math.exp %51 : vector<4x8x8xf32>
    %cst_18 = arith.constant dense<0.000000e+00> : vector<4x8xf32>
    %53 = vector.multi_reduction <add>, %52, %cst_18 [2] : vector<4x8x8xf32> to vector<4x8xf32>
    %54 = vector.shape_cast %53 : vector<4x8xf32> to vector<4x8x1xf32>
    %cst_19 = arith.constant 1.000000e+00 : f32
    %55 = vector.broadcast %cst_19 : f32 to vector<4x8x1xf32>
    %56 = arith.divf %55, %54 : vector<4x8x1xf32>
    %57 = vector.broadcast %56 : vector<4x8x1xf32> to vector<4x8x8xf32>
    %58 = arith.mulf %52, %57 : vector<4x8x8xf32>
    %59 = arith.truncf %58 : vector<4x8x8xf32> to vector<4x8x8xbf16>
    %cst_20 = arith.constant dense<0.000000e+00> : vector<4x8x8xf32>
    %60 = tpu.matmul %59, %46, %cst_20 {dimension_numbers = #tpu.dot_dimension_numbers<[2], [1], [1], [2], [0, 0, 0, 1, 1, 2], [0], [0]>} : vector<4x8x8xbf16>, vector<4x8x8xbf16>, vector<4x8x8xf32> -> vector<4x8x8xf32>
    %61 = tpu.transpose %60, [1, 0, 2] : vector<4x8x8xf32> -> vector<8x4x8xf32>
    %62 = vector.shape_cast %61 : vector<8x4x8xf32> to vector<8x32xf32>
    %63 = vector.extract_strided_slice %35 {offsets = [8, 0], sizes = [8, 32], strides = [1, 1]} : vector<16x32xbf16> to vector<8x32xbf16>
    %64 = vector.shape_cast %63 : vector<8x32xbf16> to vector<8x4x8xbf16>
    %65 = tpu.transpose %64, [1, 0, 2] : vector<8x4x8xbf16> -> vector<4x8x8xbf16>
    %66 = vector.extract_strided_slice %36 {offsets = [8, 0], sizes = [8, 32], strides = [1, 1]} : vector<16x32xbf16> to vector<8x32xbf16>
    %67 = vector.shape_cast %66 : vector<8x32xbf16> to vector<8x4x8xbf16>
    %68 = tpu.transpose %67, [1, 0, 2] : vector<8x4x8xbf16> -> vector<4x8x8xbf16>
    %69 = vector.extract_strided_slice %37 {offsets = [8, 0], sizes = [8, 32], strides = [1, 1]} : vector<16x32xbf16> to vector<8x32xbf16>
    %70 = vector.shape_cast %69 : vector<8x32xbf16> to vector<8x4x8xbf16>
    %71 = tpu.transpose %70, [1, 0, 2] : vector<8x4x8xbf16> -> vector<4x8x8xbf16>
    %cst_21 = arith.constant dense<0.000000e+00> : vector<4x8x8xf32>
    %72 = tpu.matmul %65, %68, %cst_21 {dimension_numbers = #tpu.dot_dimension_numbers<[2], [2], [1], [1], [0, 0, 0, 1, 1, 1], [0], [0]>} : vector<4x8x8xbf16>, vector<4x8x8xbf16>, vector<4x8x8xf32> -> vector<4x8x8xf32>
    %cst_22 = arith.constant dense<0xFF800000> : vector<4x8xf32>
    %73 = vector.multi_reduction <maximumf>, %72, %cst_22 [2] : vector<4x8x8xf32> to vector<4x8xf32>
    %74 = vector.shape_cast %73 : vector<4x8xf32> to vector<4x8x1xf32>
    %75 = vector.broadcast %74 : vector<4x8x1xf32> to vector<4x8x8xf32>
    %76 = arith.subf %72, %75 : vector<4x8x8xf32>
    %77 = math.exp %76 : vector<4x8x8xf32>
    %cst_23 = arith.constant dense<0.000000e+00> : vector<4x8xf32>
    %78 = vector.multi_reduction <add>, %77, %cst_23 [2] : vector<4x8x8xf32> to vector<4x8xf32>
    %79 = vector.shape_cast %78 : vector<4x8xf32> to vector<4x8x1xf32>
    %cst_24 = arith.constant 1.000000e+00 : f32
    %80 = vector.broadcast %cst_24 : f32 to vector<4x8x1xf32>
    %81 = arith.divf %80, %79 : vector<4x8x1xf32>
    %82 = vector.broadcast %81 : vector<4x8x1xf32> to vector<4x8x8xf32>
    %83 = arith.mulf %77, %82 : vector<4x8x8xf32>
    %84 = arith.truncf %83 : vector<4x8x8xf32> to vector<4x8x8xbf16>
    %cst_25 = arith.constant dense<0.000000e+00> : vector<4x8x8xf32>
    %85 = tpu.matmul %84, %71, %cst_25 {dimension_numbers = #tpu.dot_dimension_numbers<[2], [1], [1], [2], [0, 0, 0, 1, 1, 2], [0], [0]>} : vector<4x8x8xbf16>, vector<4x8x8xbf16>, vector<4x8x8xf32> -> vector<4x8x8xf32>
    %86 = tpu.transpose %85, [1, 0, 2] : vector<4x8x8xf32> -> vector<8x4x8xf32>
    %87 = vector.shape_cast %86 : vector<8x4x8xf32> to vector<8x32xf32>
    %88 = tpu.concatenate %62, %87 in 0 : vector<8x32xf32>, vector<8x32xf32> -> vector<16x32xf32>
    %89 = arith.truncf %88 : vector<16x32xf32> to vector<16x32xbf16>
    %c0_26 = arith.constant 0 : index
    %c0_27 = arith.constant 0 : index
    %c0_28 = arith.constant 0 : index
    %90 = vector.load %arg6[%c0_26, %c0_27, %c0_28] : memref<1x32x32xbf16, #tpu.memory_space<vmem>>, vector<1x32x32xbf16>
    %91 = vector.shape_cast %90 : vector<1x32x32xbf16> to vector<32x32xbf16>
    %cst_29 = arith.constant dense<0.000000e+00> : vector<16x32xf32>
    %92 = tpu.matmul %89, %91, %cst_29 {dimension_numbers = #tpu.dot_dimension_numbers<[1], [0], [0], [1], [0, 0, 1, 1], [], []>} : vector<16x32xbf16>, vector<32x32xbf16>, vector<16x32xf32> -> vector<16x32xf32>
    %c0_30 = arith.constant 0 : index
    %c0_31 = arith.constant 0 : index
    %c0_32 = arith.constant 0 : index
    %93 = vector.load %arg7[%c0_30, %c0_31, %c0_32] : memref<1x1x32xf32, #tpu.memory_space<vmem>>, vector<1x1x32xf32>
    %94 = vector.shape_cast %93 : vector<1x1x32xf32> to vector<1x32xf32>
    %95 = vector.broadcast %94 : vector<1x32xf32> to vector<16x32xf32>
    %96 = arith.addf %92, %95 : vector<16x32xf32>
    %97 = arith.addf %3, %96 : vector<16x32xf32>
    %c0_33 = arith.constant 0 : index
    %c0_34 = arith.constant 0 : index
    %c0_35 = arith.constant 0 : index
    %98 = vector.load %arg8[%c0_33, %c0_34, %c0_35] : memref<1x1x32xf32, #tpu.memory_space<vmem>>, vector<1x1x32xf32>
    %99 = vector.shape_cast %98 : vector<1x1x32xf32> to vector<1x32xf32>
    %c0_36 = arith.constant 0 : index
    %c0_37 = arith.constant 0 : index
    %c0_38 = arith.constant 0 : index
    %100 = vector.load %arg9[%c0_36, %c0_37, %c0_38] : memref<1x1x32xf32, #tpu.memory_space<vmem>>, vector<1x1x32xf32>
    %101 = vector.shape_cast %100 : vector<1x1x32xf32> to vector<1x32xf32>
    %cst_39 = arith.constant dense<0.000000e+00> : vector<16xf32>
    %102 = vector.multi_reduction <add>, %97, %cst_39 [1] : vector<16x32xf32> to vector<16xf32>
    %103 = vector.shape_cast %102 : vector<16xf32> to vector<16x1xf32>
    %cst_40 = arith.constant 3.200000e+01 : f32
    %104 = vector.broadcast %cst_40 : f32 to vector<16x1xf32>
    %105 = arith.divf %103, %104 : vector<16x1xf32>
    %106 = vector.broadcast %105 : vector<16x1xf32> to vector<16x32xf32>
    %107 = arith.subf %97, %106 : vector<16x32xf32>
    %108 = arith.mulf %107, %107 : vector<16x32xf32>
    %cst_41 = arith.constant dense<0.000000e+00> : vector<16xf32>
    %109 = vector.multi_reduction <add>, %108, %cst_41 [1] : vector<16x32xf32> to vector<16xf32>
    %110 = vector.shape_cast %109 : vector<16xf32> to vector<16x1xf32>
    %cst_42 = arith.constant 3.200000e+01 : f32
    %111 = vector.broadcast %cst_42 : f32 to vector<16x1xf32>
    %112 = arith.divf %110, %111 : vector<16x1xf32>
    %113 = vector.broadcast %105 : vector<16x1xf32> to vector<16x32xf32>
    %114 = arith.subf %97, %113 : vector<16x32xf32>
    %cst_43 = arith.constant 9.99999974E-6 : f32
    %115 = vector.broadcast %cst_43 : f32 to vector<16x1xf32>
    %116 = arith.addf %112, %115 : vector<16x1xf32>
    %117 = math.rsqrt %116 : vector<16x1xf32>
    %118 = vector.broadcast %117 : vector<16x1xf32> to vector<16x32xf32>
    %119 = arith.mulf %114, %118 : vector<16x32xf32>
    %120 = vector.broadcast %99 : vector<1x32xf32> to vector<16x32xf32>
    %121 = arith.mulf %119, %120 : vector<16x32xf32>
    %122 = vector.broadcast %101 : vector<1x32xf32> to vector<16x32xf32>
    %123 = arith.addf %121, %122 : vector<16x32xf32>
    %124 = arith.truncf %123 : vector<16x32xf32> to vector<16x32xbf16>
    %c0_44 = arith.constant 0 : index
    %c0_45 = arith.constant 0 : index
    %c0_46 = arith.constant 0 : index
    %125 = vector.load %arg10[%c0_44, %c0_45, %c0_46] : memref<1x32x128xbf16, #tpu.memory_space<vmem>>, vector<1x32x128xbf16>
    %126 = vector.shape_cast %125 : vector<1x32x128xbf16> to vector<32x128xbf16>
    %cst_47 = arith.constant dense<0.000000e+00> : vector<16x128xf32>
    %127 = tpu.matmul %124, %126, %cst_47 {dimension_numbers = #tpu.dot_dimension_numbers<[1], [0], [0], [1], [0, 0, 1, 1], [], []>} : vector<16x32xbf16>, vector<32x128xbf16>, vector<16x128xf32> -> vector<16x128xf32>
    %c0_48 = arith.constant 0 : index
    %c0_49 = arith.constant 0 : index
    %c0_50 = arith.constant 0 : index
    %128 = vector.load %arg11[%c0_48, %c0_49, %c0_50] : memref<1x1x128xf32, #tpu.memory_space<vmem>>, vector<1x1x128xf32>
    %129 = vector.shape_cast %128 : vector<1x1x128xf32> to vector<1x128xf32>
    %130 = vector.broadcast %129 : vector<1x128xf32> to vector<16x128xf32>
    %131 = arith.addf %127, %130 : vector<16x128xf32>
    %cst_51 = arith.constant 5.000000e-01 : f32
    %132 = vector.broadcast %cst_51 : f32 to vector<16x128xf32>
    %133 = arith.mulf %132, %131 : vector<16x128xf32>
    %cst_52 = arith.constant 0.707106769 : f32
    %134 = vector.broadcast %cst_52 : f32 to vector<16x128xf32>
    %135 = arith.mulf %131, %134 : vector<16x128xf32>
    %cst_53 = arith.constant 0.000000e+00 : f32
    %136 = vector.broadcast %cst_53 : f32 to vector<16x128xf32>
    %137 = arith.cmpf oge, %135, %136 : vector<16x128xf32>
    %cst_54 = arith.constant 1.000000e+00 : f32
    %cst_55 = arith.constant -1.000000e+00 : f32
    %138 = vector.broadcast %cst_54 : f32 to vector<16x128xf32>
    %139 = vector.broadcast %cst_55 : f32 to vector<16x128xf32>
    %140 = arith.select %137, %138, %139 : vector<16x128xi1>, vector<16x128xf32>
    %141 = math.absf %135 : vector<16x128xf32>
    %cst_56 = arith.constant 0.327591091 : f32
    %142 = vector.broadcast %cst_56 : f32 to vector<16x128xf32>
    %143 = arith.mulf %142, %141 : vector<16x128xf32>
    %cst_57 = arith.constant 1.000000e+00 : f32
    %144 = vector.broadcast %cst_57 : f32 to vector<16x128xf32>
    %145 = arith.addf %144, %143 : vector<16x128xf32>
    %cst_58 = arith.constant 1.000000e+00 : f32
    %146 = vector.broadcast %cst_58 : f32 to vector<16x128xf32>
    %147 = arith.divf %146, %145 : vector<16x128xf32>
    %cst_59 = arith.constant 1.06140542 : f32
    %148 = vector.broadcast %cst_59 : f32 to vector<16x128xf32>
    %149 = arith.mulf %148, %147 : vector<16x128xf32>
    %cst_60 = arith.constant -1.45315206 : f32
    %150 = vector.broadcast %cst_60 : f32 to vector<16x128xf32>
    %151 = arith.addf %149, %150 : vector<16x128xf32>
    %152 = arith.mulf %151, %147 : vector<16x128xf32>
    %cst_61 = arith.constant 1.42141378 : f32
    %153 = vector.broadcast %cst_61 : f32 to vector<16x128xf32>
    %154 = arith.addf %152, %153 : vector<16x128xf32>
    %155 = arith.mulf %154, %147 : vector<16x128xf32>
    %cst_62 = arith.constant -0.284496725 : f32
    %156 = vector.broadcast %cst_62 : f32 to vector<16x128xf32>
    %157 = arith.addf %155, %156 : vector<16x128xf32>
    %158 = arith.mulf %157, %147 : vector<16x128xf32>
    %cst_63 = arith.constant 0.254829586 : f32
    %159 = vector.broadcast %cst_63 : f32 to vector<16x128xf32>
    %160 = arith.addf %158, %159 : vector<16x128xf32>
    %161 = arith.mulf %160, %147 : vector<16x128xf32>
    %cst_64 = arith.constant 0.000000e+00 : f32
    %162 = vector.broadcast %cst_64 : f32 to vector<16x128xf32>
    %163 = arith.subf %162, %141 : vector<16x128xf32>
    %164 = arith.mulf %163, %141 : vector<16x128xf32>
    %165 = math.exp %164 : vector<16x128xf32>
    %166 = arith.mulf %161, %165 : vector<16x128xf32>
    %cst_65 = arith.constant 1.000000e+00 : f32
    %167 = vector.broadcast %cst_65 : f32 to vector<16x128xf32>
    %168 = arith.subf %167, %166 : vector<16x128xf32>
    %169 = arith.mulf %140, %168 : vector<16x128xf32>
    %cst_66 = arith.constant 1.000000e+00 : f32
    %170 = vector.broadcast %cst_66 : f32 to vector<16x128xf32>
    %171 = arith.addf %170, %169 : vector<16x128xf32>
    %172 = arith.mulf %133, %171 : vector<16x128xf32>
    %173 = arith.truncf %172 : vector<16x128xf32> to vector<16x128xbf16>
    %c0_67 = arith.constant 0 : index
    %c0_68 = arith.constant 0 : index
    %c0_69 = arith.constant 0 : index
    %174 = vector.load %arg12[%c0_67, %c0_68, %c0_69] : memref<1x128x32xbf16, #tpu.memory_space<vmem>>, vector<1x128x32xbf16>
    %175 = vector.shape_cast %174 : vector<1x128x32xbf16> to vector<128x32xbf16>
    %cst_70 = arith.constant dense<0.000000e+00> : vector<16x32xf32>
    %176 = tpu.matmul %173, %175, %cst_70 {dimension_numbers = #tpu.dot_dimension_numbers<[1], [0], [0], [1], [0, 0, 1, 1], [], []>} : vector<16x128xbf16>, vector<128x32xbf16>, vector<16x32xf32> -> vector<16x32xf32>
    %c0_71 = arith.constant 0 : index
    %c0_72 = arith.constant 0 : index
    %c0_73 = arith.constant 0 : index
    %177 = vector.load %arg13[%c0_71, %c0_72, %c0_73] : memref<1x1x32xf32, #tpu.memory_space<vmem>>, vector<1x1x32xf32>
    %178 = vector.shape_cast %177 : vector<1x1x32xf32> to vector<1x32xf32>
    %179 = vector.broadcast %178 : vector<1x32xf32> to vector<16x32xf32>
    %180 = arith.addf %176, %179 : vector<16x32xf32>
    %181 = arith.addf %97, %180 : vector<16x32xf32>
    %c0_74 = arith.constant 0 : index
    %c0_75 = arith.constant 0 : index
    %182 = vector.load %arg17[%c0_74, %c0_75] : memref<16x32xf32, #tpu.memory_space<vmem>>, vector<16x32xf32>
    tpu.vector_store %arg17[%c0_74, %c0_75], %181 {strides = array<i32>} : memref<16x32xf32, #tpu.memory_space<vmem>>, vector<16x32xf32>,
    %c1_i32 = arith.constant 1 : i32
    %183 = arith.cmpi eq, %arg1, %c1_i32 : i32
    %184 = arith.extui %183 : i1 to i32
    %c0_i32_76 = arith.constant 0 : i32
    %185 = arith.cmpi ne, %184, %c0_i32_76 : i32
    scf.if %185 {
      %c0_77 = arith.constant 0 : index
      %c0_78 = arith.constant 0 : index
      %186 = vector.load %arg14[%c0_77, %c0_78] : memref<1x32xf32, #tpu.memory_space<vmem>>, vector<1x32xf32>
      %187 = vector.shape_cast %186 : vector<1x32xf32> to vector<32xf32>
      %c0_79 = arith.constant 0 : index
      %c0_80 = arith.constant 0 : index
      %188 = vector.load %arg15[%c0_79, %c0_80] : memref<1x32xf32, #tpu.memory_space<vmem>>, vector<1x32xf32>
      %189 = vector.shape_cast %188 : vector<1x32xf32> to vector<32xf32>
      %cst_81 = arith.constant dense<0.000000e+00> : vector<16xf32>
      %190 = vector.multi_reduction <add>, %181, %cst_81 [1] : vector<16x32xf32> to vector<16xf32>
      %191 = vector.shape_cast %190 : vector<16xf32> to vector<16x1xf32>
      %cst_82 = arith.constant 3.200000e+01 : f32
      %192 = vector.broadcast %cst_82 : f32 to vector<16x1xf32>
      %193 = arith.divf %191, %192 : vector<16x1xf32>
      %194 = vector.broadcast %193 : vector<16x1xf32> to vector<16x32xf32>
      %195 = arith.subf %181, %194 : vector<16x32xf32>
      %196 = arith.mulf %195, %195 : vector<16x32xf32>
      %cst_83 = arith.constant dense<0.000000e+00> : vector<16xf32>
      %197 = vector.multi_reduction <add>, %196, %cst_83 [1] : vector<16x32xf32> to vector<16xf32>
      %198 = vector.shape_cast %197 : vector<16xf32> to vector<16x1xf32>
      %cst_84 = arith.constant 3.200000e+01 : f32
      %199 = vector.broadcast %cst_84 : f32 to vector<16x1xf32>
      %200 = arith.divf %198, %199 : vector<16x1xf32>
      %201 = vector.broadcast %193 : vector<16x1xf32> to vector<16x32xf32>
      %202 = arith.subf %181, %201 : vector<16x32xf32>
      %cst_85 = arith.constant 9.99999974E-6 : f32
      %203 = vector.broadcast %cst_85 : f32 to vector<16x1xf32>
      %204 = arith.addf %200, %203 : vector<16x1xf32>
      %205 = math.rsqrt %204 : vector<16x1xf32>
      %206 = vector.broadcast %205 : vector<16x1xf32> to vector<16x32xf32>
      %207 = arith.mulf %202, %206 : vector<16x32xf32>
      %208 = vector.shape_cast %187 : vector<32xf32> to vector<1x32xf32>
      %209 = vector.broadcast %208 : vector<1x32xf32> to vector<16x32xf32>
      %210 = arith.mulf %207, %209 : vector<16x32xf32>
      %211 = vector.shape_cast %189 : vector<32xf32> to vector<1x32xf32>
      %212 = vector.broadcast %211 : vector<1x32xf32> to vector<16x32xf32>
      %213 = arith.addf %210, %212 : vector<16x32xf32>
      %214 = vector.shape_cast %213 : vector<16x32xf32> to vector<2x8x32xf32>
      %c0_86 = arith.constant 0 : index
      %c0_87 = arith.constant 0 : index
      %c0_88 = arith.constant 0 : index
      %215 = vector.load %arg16[%c0_86, %c0_87, %c0_88] : memref<2x8x32xf32, #tpu.memory_space<vmem>>, vector<2x8x32xf32>
      tpu.vector_store %arg16[%c0_86, %c0_87, %c0_88], %214 {strides = array<i32>} : memref<2x8x32xf32, #tpu.memory_space<vmem>>, vector<2x8x32xf32>,
    } else {
    }
    return
  }
  func.func @transform_0(%arg0: i32, %arg1: i32) -> (i32, i32, i32) {
    %c0_i32 = arith.constant 0 : i32
    %c0_i32_0 = arith.constant 0 : i32
    %c0_i32_1 = arith.constant 0 : i32
    return %arg0, %c0_i32, %c0_i32_0 : i32, i32, i32
  }
  func.func @transform_1(%arg0: i32, %arg1: i32) -> (i32, i32, i32) {
    %c0_i32 = arith.constant 0 : i32
    %c0_i32_0 = arith.constant 0 : i32
    %c0_i32_1 = arith.constant 0 : i32
    return %arg1, %c0_i32, %c0_i32_0 : i32, i32, i32
  }
  func.func @transform_2(%arg0: i32, %arg1: i32) -> (i32, i32, i32) {
    %c0_i32 = arith.constant 0 : i32
    %c0_i32_0 = arith.constant 0 : i32
    %c0_i32_1 = arith.constant 0 : i32
    return %arg1, %c0_i32, %c0_i32_0 : i32, i32, i32
  }
  func.func @transform_3(%arg0: i32, %arg1: i32) -> (i32, i32, i32) {
    %c0_i32 = arith.constant 0 : i32
    %c0_i32_0 = arith.constant 0 : i32
    %c0_i32_1 = arith.constant 0 : i32
    return %arg1, %c0_i32, %c0_i32_0 : i32, i32, i32
  }
  func.func @transform_4(%arg0: i32, %arg1: i32) -> (i32, i32, i32) {
    %c0_i32 = arith.constant 0 : i32
    %c0_i32_0 = arith.constant 0 : i32
    %c0_i32_1 = arith.constant 0 : i32
    return %arg1, %c0_i32, %c0_i32_0 : i32, i32, i32
  }
  func.func @transform_5(%arg0: i32, %arg1: i32) -> (i32, i32, i32) {
    %c0_i32 = arith.constant 0 : i32
    %c0_i32_0 = arith.constant 0 : i32
    %c0_i32_1 = arith.constant 0 : i32
    return %arg1, %c0_i32, %c0_i32_0 : i32, i32, i32
  }
  func.func @transform_6(%arg0: i32, %arg1: i32) -> (i32, i32, i32) {
    %c0_i32 = arith.constant 0 : i32
    %c0_i32_0 = arith.constant 0 : i32
    %c0_i32_1 = arith.constant 0 : i32
    return %arg1, %c0_i32, %c0_i32_0 : i32, i32, i32
  }
  func.func @transform_7(%arg0: i32, %arg1: i32) -> (i32, i32, i32) {
    %c0_i32 = arith.constant 0 : i32
    %c0_i32_0 = arith.constant 0 : i32
    %c0_i32_1 = arith.constant 0 : i32
    return %arg1, %c0_i32, %c0_i32_0 : i32, i32, i32
  }
  func.func @transform_8(%arg0: i32, %arg1: i32) -> (i32, i32, i32) {
    %c0_i32 = arith.constant 0 : i32
    %c0_i32_0 = arith.constant 0 : i32
    %c0_i32_1 = arith.constant 0 : i32
    return %arg1, %c0_i32, %c0_i32_0 : i32, i32, i32
  }
  func.func @transform_9(%arg0: i32, %arg1: i32) -> (i32, i32, i32) {
    %c0_i32 = arith.constant 0 : i32
    %c0_i32_0 = arith.constant 0 : i32
    %c0_i32_1 = arith.constant 0 : i32
    return %arg1, %c0_i32, %c0_i32_0 : i32, i32, i32
  }
  func.func @transform_10(%arg0: i32, %arg1: i32) -> (i32, i32, i32) {
    %c0_i32 = arith.constant 0 : i32
    %c0_i32_0 = arith.constant 0 : i32
    %c0_i32_1 = arith.constant 0 : i32
    return %arg1, %c0_i32, %c0_i32_0 : i32, i32, i32
  }
  func.func @transform_11(%arg0: i32, %arg1: i32) -> (i32, i32, i32) {
    %c0_i32 = arith.constant 0 : i32
    %c0_i32_0 = arith.constant 0 : i32
    %c0_i32_1 = arith.constant 0 : i32
    return %arg1, %c0_i32, %c0_i32_0 : i32, i32, i32
  }
  func.func @transform_12(%arg0: i32, %arg1: i32) -> (i32, i32) {
    %c0_i32 = arith.constant 0 : i32
    %c0_i32_0 = arith.constant 0 : i32
    %c0_i32_1 = arith.constant 0 : i32
    return %c0_i32, %c0_i32_0 : i32, i32
  }
  func.func @transform_13(%arg0: i32, %arg1: i32) -> (i32, i32) {
    %c0_i32 = arith.constant 0 : i32
    %c0_i32_0 = arith.constant 0 : i32
    %c0_i32_1 = arith.constant 0 : i32
    return %c0_i32, %c0_i32_0 : i32, i32
  }
  func.func @transform_14(%arg0: i32, %arg1: i32) -> (i32, i32, i32) {
    %c0_i32 = arith.constant 0 : i32
    %c0_i32_0 = arith.constant 0 : i32
    %c0_i32_1 = arith.constant 0 : i32
    return %arg0, %c0_i32, %c0_i32_0 : i32, i32, i32
  }
}

</mosaic_0001>

<llo_original>
// kernel: tpu_custom_call.1
$region0: #{tpu_custom_call.1}
  #allocation0 [shape = 'u32[]', space=smem, size = 0x4, offset = 0x4, fixed_abs, tag = 'smem constant byte address 0x4 - core index']
  #allocation1 [shape = 'u32[72,128]{1,0:T(1,128)}', space=vmem, size = 0x9000, scoped, tag = 'internal scratch']
  #allocation2 [shape = 'f32[16,32]{1,0:T(8,128)}', space=vmem, size = 0x2000, scoped, tag = 'scratch operand']
  %s0 = inlined_call_operand.vmem [shape: f32[2,8,32], index: 0, kind: input, shape index: {}]
  %s1 = inlined_call_operand.vmem [shape: f32[2,1,32], index: 1, kind: input, shape index: {}]
  %s2 = inlined_call_operand.vmem [shape: f32[2,1,32], index: 2, kind: input, shape index: {}]
  %s3 = inlined_call_operand.vmem [shape: bf16[2,32,96], index: 3, kind: input, shape index: {}]
  %s4 = inlined_call_operand.vmem [shape: bf16[2,32,32], index: 4, kind: input, shape index: {}]
  %s5 = inlined_call_operand.vmem [shape: f32[2,1,32], index: 5, kind: input, shape index: {}]
  %s6 = inlined_call_operand.vmem [shape: f32[2,1,32], index: 6, kind: input, shape index: {}]
  %s7 = inlined_call_operand.vmem [shape: f32[2,1,32], index: 7, kind: input, shape index: {}]
  %s8 = inlined_call_operand.vmem [shape: bf16[2,32,128], index: 8, kind: input, shape index: {}]
  %s9 = inlined_call_operand.vmem [shape: f32[2,1,128], index: 9, kind: input, shape index: {}]
  %s10 = inlined_call_operand.vmem [shape: bf16[2,128,32], index: 10, kind: input, shape index: {}]
  %s11 = inlined_call_operand.vmem [shape: f32[2,1,32], index: 11, kind: input, shape index: {}]
  %s12 = inlined_call_operand.vmem [shape: f32[1,32], index: 12, kind: input, shape index: {}]
  %s13 = inlined_call_operand.vmem [shape: f32[1,32], index: 13, kind: input, shape index: {}]
  %s14 = inlined_call_operand.hbm [shape: f32[2,8,32], index: 14, kind: output, shape index: {}]
  %s15 = sld [smem:[#allocation0]]
  $region97: #{tpu_custom_call.1} parent=0
    _
  %s17 = ssub.s32 1, %s15
  %s18 = scalar_select 0, %s17, %s15
  $region1: #{tpu_custom_call.1} parent=0
    #allocation3 [shape = 'u8[8192]{0}', space=vmem, size = 0x2000, scoped, tag = 'output window, operand 0, single buffered']
    #allocation4 [shape = 's32[2]{0}', space=sflag, size = 0x8, scoped, tag = 'scoped memory for tpu_custom_call.1']
    %19 = vsyncpa [#allocation4], 0
    loop: start=0, step=1, limit=4
    $region2: #{tpu_custom_call.1} parent=1 // loop_pre_header
      _
    $region3: #{tpu_custom_call.1} parent=1 // loop_header
      %s21 = sphi 0, %s25
      %p22 = scmp.ge.s32.totalorder %s21, 4
      %s28 = sphi 0, %s40
      %s29 = sphi 0, %s36
      %s30 = sphi 0, %s28
      %s31 = sphi 0, %s29
      %s32 = sphi 0, %s30
      %s33 = sphi 0, %s31
      %s43 = sphi 0, %s45
      %s46 = sphi 0, %s43
      %s47 = sphi 0, %s46
      %s63 = sphi 0, %s47
      %s69 = sphi 0, %s71
      %s72 = sphi 0, %s69
      %s73 = sphi 0, %s72
      %s89 = sphi 0, %s73
      %s95 = sphi 0, %s97
      %s98 = sphi 0, %s95
      %s99 = sphi 0, %s98
      %s115 = sphi 0, %s99
      %s121 = sphi 0, %s123
      %s124 = sphi 0, %s121
      %s125 = sphi 0, %s124
      %s141 = sphi 0, %s125
      %s147 = sphi 0, %s149
      %s150 = sphi 0, %s147
      %s151 = sphi 0, %s150
      %s167 = sphi 0, %s151
      %s173 = sphi 0, %s175
      %s176 = sphi 0, %s173
      %s177 = sphi 0, %s176
      %s193 = sphi 0, %s177
      %s199 = sphi 0, %s201
      %s202 = sphi 0, %s199
      %s203 = sphi 0, %s202
      %s219 = sphi 0, %s203
      %s225 = sphi 0, %s227
      %s228 = sphi 0, %s225
      %s229 = sphi 0, %s228
      %s245 = sphi 0, %s229
      %s251 = sphi 0, %s253
      %s254 = sphi 0, %s251
      %s255 = sphi 0, %s254
      %s271 = sphi 0, %s255
      %s277 = sphi 0, %s279
      %s280 = sphi 0, %s277
      %s281 = sphi 0, %s280
      %s297 = sphi 0, %s281
      %s303 = sphi 0, %s305
      %s306 = sphi 0, %s303
      %s307 = sphi 0, %s306
      %s323 = sphi 0, %s307
      %s329 = sphi 0, %s331
      %s332 = sphi 0, %s329
      %s333 = sphi 0, %s332
      %s349 = sphi 0, %s333
      %s353 = sphi 0, %s353
      %s355 = sphi 0, %s353
      %s356 = sphi 0, %s355
      %s370 = sphi 0, %s356
      %s374 = sphi 0, %s374
      %s376 = sphi 0, %s374
      %s377 = sphi 0, %s376
      %s391 = sphi 0, %s377
      %s397 = sphi 0, %s399
      %s400 = sphi 0, %s397
      %s401 = sphi 0, %s400
      %s417 = sphi 0, %s401
    $region4: #{tpu_custom_call.1} parent=1 // loop_header_branch
      %24 = sbr.rel (%p22) target = $region8
    $region5: #{tpu_custom_call.1} parent=1 // loop_body
      %s26 = ssub.s32 %s21, 1
      %s27 = ssub.s32 %s21, 2
      %s34 = sadd.s32 1, %s29
      %p35 = scmp.ge.s32.totalorder %s34, 2
      %s36 = scalar_select %p35, 0, %s34
      %s37 = sadd.s32 1, %s28
      %s38 = scalar_select %p35, %s37, %s28
      %p39 = scmp.ge.s32.totalorder %s38, 1
      %s40 = scalar_select %p39, 0, %s38
      %s41 = ssub.s32 %s28, %s40
      %p42 = scmp.eq.s32.totalorder %s41, 0
      %s44 = sadd.s32 %s43, 1
      %s45 = scalar_select %p42, %s43, %s44
      %p48 = pneg %p42
      %p49 = scmp.eq.s32.totalorder %s21, 1
      %p50 = por %p48, %p49
      %p51 = scmp.ne.s32.totalorder %s43, %s46
      %p52 = scmp.eq.s32.totalorder %s21, 0
      %p53 = por %p51, %p52
      %p54 = scmp.ne.s32.totalorder %s43, %s46
      %p55 = scmp.eq.s32.totalorder %s26, 1
      %p56 = por %p54, %p55
      %p57 = scmp.ne.s32.totalorder %s46, %s47
      %p58 = scmp.eq.s32.totalorder %s26, 0
      %p59 = por %p57, %p58
      %p60 = scmp.ne.s32.totalorder %s46, %s47
      %p61 = scmp.eq.s32.totalorder %s27, 1
      %p62 = por %p60, %p61
      %p64 = scmp.ne.s32.totalorder %s47, %s63
      %p65 = scmp.eq.s32.totalorder %s27, 0
      %p66 = por %p64, %p65
      %s67 = ssub.s32 %s29, %s36
      %p68 = scmp.eq.s32.totalorder %s67, 0
      %s70 = sadd.s32 %s69, 1
      %s71 = scalar_select %p68, %s69, %s70
      %p74 = pneg %p68
      %p75 = scmp.eq.s32.totalorder %s21, 1
      %p76 = por %p74, %p75
      %p77 = scmp.ne.s32.totalorder %s69, %s72
      %p78 = scmp.eq.s32.totalorder %s21, 0
      %p79 = por %p77, %p78
      %p80 = scmp.ne.s32.totalorder %s69, %s72
      %p81 = scmp.eq.s32.totalorder %s26, 1
      %p82 = por %p80, %p81
      %p83 = scmp.ne.s32.totalorder %s72, %s73
      %p84 = scmp.eq.s32.totalorder %s26, 0
      %p85 = por %p83, %p84
      %p86 = scmp.ne.s32.totalorder %s72, %s73
      %p87 = scmp.eq.s32.totalorder %s27, 1
      %p88 = por %p86, %p87
      %p90 = scmp.ne.s32.totalorder %s73, %s89
      %p91 = scmp.eq.s32.totalorder %s27, 0
      %p92 = por %p90, %p91
      %s93 = ssub.s32 %s29, %s36
      %p94 = scmp.eq.s32.totalorder %s93, 0
      %s96 = sadd.s32 %s95, 1
      %s97 = scalar_select %p94, %s95, %s96
      %p100 = pneg %p94
      %p101 = scmp.eq.s32.totalorder %s21, 1
      %p102 = por %p100, %p101
      %p103 = scmp.ne.s32.totalorder %s95, %s98
      %p104 = scmp.eq.s32.totalorder %s21, 0
      %p105 = por %p103, %p104
      %p106 = scmp.ne.s32.totalorder %s95, %s98
      %p107 = scmp.eq.s32.totalorder %s26, 1
      %p108 = por %p106, %p107
      %p109 = scmp.ne.s32.totalorder %s98, %s99
      %p110 = scmp.eq.s32.totalorder %s26, 0
      %p111 = por %p109, %p110
      %p112 = scmp.ne.s32.totalorder %s98, %s99
      %p113 = scmp.eq.s32.totalorder %s27, 1
      %p114 = por %p112, %p113
      %p116 = scmp.ne.s32.totalorder %s99, %s115
      %p117 = scmp.eq.s32.totalorder %s27, 0
      %p118 = por %p116, %p117
      %s119 = ssub.s32 %s29, %s36
      %p120 = scmp.eq.s32.totalorder %s119, 0
      %s122 = sadd.s32 %s121, 1
      %s123 = scalar_select %p120, %s121, %s122
      %p126 = pneg %p120
      %p127 = scmp.eq.s32.totalorder %s21, 1
      %p128 = por %p126, %p127
      %p129 = scmp.ne.s32.totalorder %s121, %s124
      %p130 = scmp.eq.s32.totalorder %s21, 0
      %p131 = por %p129, %p130
      %p132 = scmp.ne.s32.totalorder %s121, %s124
      %p133 = scmp.eq.s32.totalorder %s26, 1
      %p134 = por %p132, %p133
      %p135 = scmp.ne.s32.totalorder %s124, %s125
      %p136 = scmp.eq.s32.totalorder %s26, 0
      %p137 = por %p135, %p136
      %p138 = scmp.ne.s32.totalorder %s124, %s125
      %p139 = scmp.eq.s32.totalorder %s27, 1
      %p140 = por %p138, %p139
      %p142 = scmp.ne.s32.totalorder %s125, %s141
      %p143 = scmp.eq.s32.totalorder %s27, 0
      %p144 = por %p142, %p143
      %s145 = ssub.s32 %s29, %s36
      %p146 = scmp.eq.s32.totalorder %s145, 0
      %s148 = sadd.s32 %s147, 1
      %s149 = scalar_select %p146, %s147, %s148
      %p152 = pneg %p146
      %p153 = scmp.eq.s32.totalorder %s21, 1
      %p154 = por %p152, %p153
      %p155 = scmp.ne.s32.totalorder %s147, %s150
      %p156 = scmp.eq.s32.totalorder %s21, 0
      %p157 = por %p155, %p156
      %p158 = scmp.ne.s32.totalorder %s147, %s150
      %p159 = scmp.eq.s32.totalorder %s26, 1
      %p160 = por %p158, %p159
      %p161 = scmp.ne.s32.totalorder %s150, %s151
      %p162 = scmp.eq.s32.totalorder %s26, 0
      %p163 = por %p161, %p162
      %p164 = scmp.ne.s32.totalorder %s150, %s151
      %p165 = scmp.eq.s32.totalorder %s27, 1
      %p166 = por %p164, %p165
      %p168 = scmp.ne.s32.totalorder %s151, %s167
      %p169 = scmp.eq.s32.totalorder %s27, 0
      %p170 = por %p168, %p169
      %s171 = ssub.s32 %s29, %s36
      %p172 = scmp.eq.s32.totalorder %s171, 0
      %s174 = sadd.s32 %s173, 1
      %s175 = scalar_select %p172, %s173, %s174
      %p178 = pneg %p172
      %p179 = scmp.eq.s32.totalorder %s21, 1
      %p180 = por %p178, %p179
      %p181 = scmp.ne.s32.totalorder %s173, %s176
      %p182 = scmp.eq.s32.totalorder %s21, 0
      %p183 = por %p181, %p182
      %p184 = scmp.ne.s32.totalorder %s173, %s176
      %p185 = scmp.eq.s32.totalorder %s26, 1
      %p186 = por %p184, %p185
      %p187 = scmp.ne.s32.totalorder %s176, %s177
      %p188 = scmp.eq.s32.totalorder %s26, 0
      %p189 = por %p187, %p188
      %p190 = scmp.ne.s32.totalorder %s176, %s177
      %p191 = scmp.eq.s32.totalorder %s27, 1
      %p192 = por %p190, %p191
      %p194 = scmp.ne.s32.totalorder %s177, %s193
      %p195 = scmp.eq.s32.totalorder %s27, 0
      %p196 = por %p194, %p195
      %s197 = ssub.s32 %s29, %s36
      %p198 = scmp.eq.s32.totalorder %s197, 0
      %s200 = sadd.s32 %s199, 1
      %s201 = scalar_select %p198, %s199, %s200
      %p204 = pneg %p198
      %p205 = scmp.eq.s32.totalorder %s21, 1
      %p206 = por %p204, %p205
      %p207 = scmp.ne.s32.totalorder %s199, %s202
      %p208 = scmp.eq.s32.totalorder %s21, 0
      %p209 = por %p207, %p208
      %p210 = scmp.ne.s32.totalorder %s199, %s202
      %p211 = scmp.eq.s32.totalorder %s26, 1
      %p212 = por %p210, %p211
      %p213 = scmp.ne.s32.totalorder %s202, %s203
      %p214 = scmp.eq.s32.totalorder %s26, 0
      %p215 = por %p213, %p214
      %p216 = scmp.ne.s32.totalorder %s202, %s203
      %p217 = scmp.eq.s32.totalorder %s27, 1
      %p218 = por %p216, %p217
      %p220 = scmp.ne.s32.totalorder %s203, %s219
      %p221 = scmp.eq.s32.totalorder %s27, 0
      %p222 = por %p220, %p221
      %s223 = ssub.s32 %s29, %s36
      %p224 = scmp.eq.s32.totalorder %s223, 0
      %s226 = sadd.s32 %s225, 1
      %s227 = scalar_select %p224, %s225, %s226
      %p230 = pneg %p224
      %p231 = scmp.eq.s32.totalorder %s21, 1
      %p232 = por %p230, %p231
      %p233 = scmp.ne.s32.totalorder %s225, %s228
      %p234 = scmp.eq.s32.totalorder %s21, 0
      %p235 = por %p233, %p234
      %p236 = scmp.ne.s32.totalorder %s225, %s228
      %p237 = scmp.eq.s32.totalorder %s26, 1
      %p238 = por %p236, %p237
      %p239 = scmp.ne.s32.totalorder %s228, %s229
      %p240 = scmp.eq.s32.totalorder %s26, 0
      %p241 = por %p239, %p240
      %p242 = scmp.ne.s32.totalorder %s228, %s229
      %p243 = scmp.eq.s32.totalorder %s27, 1
      %p244 = por %p242, %p243
      %p246 = scmp.ne.s32.totalorder %s229, %s245
      %p247 = scmp.eq.s32.totalorder %s27, 0
      %p248 = por %p246, %p247
      %s249 = ssub.s32 %s29, %s36
      %p250 = scmp.eq.s32.totalorder %s249, 0
      %s252 = sadd.s32 %s251, 1
      %s253 = scalar_select %p250, %s251, %s252
      %p256 = pneg %p250
      %p257 = scmp.eq.s32.totalorder %s21, 1
      %p258 = por %p256, %p257
      %p259 = scmp.ne.s32.totalorder %s251, %s254
      %p260 = scmp.eq.s32.totalorder %s21, 0
      %p261 = por %p259, %p260
      %p262 = scmp.ne.s32.totalorder %s251, %s254
      %p263 = scmp.eq.s32.totalorder %s26, 1
      %p264 = por %p262, %p263
      %p265 = scmp.ne.s32.totalorder %s254, %s255
      %p266 = scmp.eq.s32.totalorder %s26, 0
      %p267 = por %p265, %p266
      %p268 = scmp.ne.s32.totalorder %s254, %s255
      %p269 = scmp.eq.s32.totalorder %s27, 1
      %p270 = por %p268, %p269
      %p272 = scmp.ne.s32.totalorder %s255, %s271
      %p273 = scmp.eq.s32.totalorder %s27, 0
      %p274 = por %p272, %p273
      %s275 = ssub.s32 %s29, %s36
      %p276 = scmp.eq.s32.totalorder %s275, 0
      %s278 = sadd.s32 %s277, 1
      %s279 = scalar_select %p276, %s277, %s278
      %p282 = pneg %p276
      %p283 = scmp.eq.s32.totalorder %s21, 1
      %p284 = por %p282, %p283
      %p285 = scmp.ne.s32.totalorder %s277, %s280
      %p286 = scmp.eq.s32.totalorder %s21, 0
      %p287 = por %p285, %p286
      %p288 = scmp.ne.s32.totalorder %s277, %s280
      %p289 = scmp.eq.s32.totalorder %s26, 1
      %p290 = por %p288, %p289
      %p291 = scmp.ne.s32.totalorder %s280, %s281
      %p292 = scmp.eq.s32.totalorder %s26, 0
      %p293 = por %p291, %p292
      %p294 = scmp.ne.s32.totalorder %s280, %s281
      %p295 = scmp.eq.s32.totalorder %s27, 1
      %p296 = por %p294, %p295
      %p298 = scmp.ne.s32.totalorder %s281, %s297
      %p299 = scmp.eq.s32.totalorder %s27, 0
      %p300 = por %p298, %p299
      %s301 = ssub.s32 %s29, %s36
      %p302 = scmp.eq.s32.totalorder %s301, 0
      %s304 = sadd.s32 %s303, 1
      %s305 = scalar_select %p302, %s303, %s304
      %p308 = pneg %p302
      %p309 = scmp.eq.s32.totalorder %s21, 1
      %p310 = por %p308, %p309
      %p311 = scmp.ne.s32.totalorder %s303, %s306
      %p312 = scmp.eq.s32.totalorder %s21, 0
      %p313 = por %p311, %p312
      %p314 = scmp.ne.s32.totalorder %s303, %s306
      %p315 = scmp.eq.s32.totalorder %s26, 1
      %p316 = por %p314, %p315
      %p317 = scmp.ne.s32.totalorder %s306, %s307
      %p318 = scmp.eq.s32.totalorder %s26, 0
      %p319 = por %p317, %p318
      %p320 = scmp.ne.s32.totalorder %s306, %s307
      %p321 = scmp.eq.s32.totalorder %s27, 1
      %p322 = por %p320, %p321
      %p324 = scmp.ne.s32.totalorder %s307, %s323
      %p325 = scmp.eq.s32.totalorder %s27, 0
      %p326 = por %p324, %p325
      %s327 = ssub.s32 %s29, %s36
      %p328 = scmp.eq.s32.totalorder %s327, 0
      %s330 = sadd.s32 %s329, 1
      %s331 = scalar_select %p328, %s329, %s330
      %p334 = pneg %p328
      %p335 = scmp.eq.s32.totalorder %s21, 1
      %p336 = por %p334, %p335
      %p337 = scmp.ne.s32.totalorder %s329, %s332
      %p338 = scmp.eq.s32.totalorder %s21, 0
      %p339 = por %p337, %p338
      %p340 = scmp.ne.s32.totalorder %s329, %s332
      %p341 = scmp.eq.s32.totalorder %s26, 1
      %p342 = por %p340, %p341
      %p343 = scmp.ne.s32.totalorder %s332, %s333
      %p344 = scmp.eq.s32.totalorder %s26, 0
      %p345 = por %p343, %p344
      %p346 = scmp.ne.s32.totalorder %s332, %s333
      %p347 = scmp.eq.s32.totalorder %s27, 1
      %p348 = por %p346, %p347
      %p350 = scmp.ne.s32.totalorder %s333, %s349
      %p351 = scmp.eq.s32.totalorder %s27, 0
      %p352 = por %p350, %p351
      %s354 = sadd.s32 %s353, 1
      %p357 = scmp.eq.s32.totalorder %s21, 1
      %p358 = scmp.ne.s32.totalorder %s353, %s355
      %p359 = scmp.eq.s32.totalorder %s21, 0
      %p360 = por %p358, %p359
      %p361 = scmp.ne.s32.totalorder %s353, %s355
      %p362 = scmp.eq.s32.totalorder %s26, 1
      %p363 = por %p361, %p362
      %p364 = scmp.ne.s32.totalorder %s355, %s356
      %p365 = scmp.eq.s32.totalorder %s26, 0
      %p366 = por %p364, %p365
      %p367 = scmp.ne.s32.totalorder %s355, %s356
      %p368 = scmp.eq.s32.totalorder %s27, 1
      %p369 = por %p367, %p368
      %p371 = scmp.ne.s32.totalorder %s356, %s370
      %p372 = scmp.eq.s32.totalorder %s27, 0
      %p373 = por %p371, %p372
      %s375 = sadd.s32 %s374, 1
      %p378 = scmp.eq.s32.totalorder %s21, 1
      %p379 = scmp.ne.s32.totalorder %s374, %s376
      %p380 = scmp.eq.s32.totalorder %s21, 0
      %p381 = por %p379, %p380
      %p382 = scmp.ne.s32.totalorder %s374, %s376
      %p383 = scmp.eq.s32.totalorder %s26, 1
      %p384 = por %p382, %p383
      %p385 = scmp.ne.s32.totalorder %s376, %s377
      %p386 = scmp.eq.s32.totalorder %s26, 0
      %p387 = por %p385, %p386
      %p388 = scmp.ne.s32.totalorder %s376, %s377
      %p389 = scmp.eq.s32.totalorder %s27, 1
      %p390 = por %p388, %p389
      %p392 = scmp.ne.s32.totalorder %s377, %s391
      %p393 = scmp.eq.s32.totalorder %s27, 0
      %p394 = por %p392, %p393
      %s395 = ssub.s32 %s28, %s40
      %p396 = scmp.eq.s32.totalorder %s395, 0
      %s398 = sadd.s32 %s397, 1
      %s399 = scalar_select %p396, %s397, %s398
      %p402 = pneg %p396
      %p403 = scmp.eq.s32.totalorder %s21, 1
      %p404 = por %p402, %p403
      %p405 = scmp.ne.s32.totalorder %s397, %s400
      %p406 = scmp.eq.s32.totalorder %s21, 0
      %p407 = por %p405, %p406
      %p408 = scmp.ne.s32.totalorder %s397, %s400
      %p409 = scmp.eq.s32.totalorder %s26, 1
      %p410 = por %p408, %p409
      %p411 = scmp.ne.s32.totalorder %s400, %s401
      %p412 = scmp.eq.s32.totalorder %s26, 0
      %p413 = por %p411, %p412
      %p414 = scmp.ne.s32.totalorder %s400, %s401
      %p415 = scmp.eq.s32.totalorder %s27, 1
      %p416 = por %p414, %p415
      %p418 = scmp.ne.s32.totalorder %s401, %s417
      %p419 = scmp.eq.s32.totalorder %s27, 0
      %p420 = por %p418, %p419
      %p421 = scmp.le.s32.totalorder 1, %s21
      %p422 = scmp.lt.s32.totalorder %s21, 3
      %p423 = pnand %p421, %p422
      %p424 = pneg %p423
      // Predicated region
      $region9: #{tpu_custom_call.1} parent=5 // pred_check
        _
      $region10: #{tpu_custom_call.1} parent=5 // pred_check_branch
        %426 = sbr.rel (%p423) target = $region12
      $region11: #{tpu_custom_call.1} parent=5 // pred_region
        %s427 = ssub.s32 %s21, 1
        // Predicated region
        $region13: #{tpu_custom_call.1} parent=11 // pred_check
          %p428 = pneg %p59
        $region14: #{tpu_custom_call.1} parent=11 // pred_check_branch
          %430 = sbr.rel (%p428) target = $region16
        $region15: #{tpu_custom_call.1} parent=11 // pred_region
          %s431 = smul.u32 2, %s30
          %p432 = scmp.lt.s32.totalorder %s431, 1
          %s433 = scalar_select %p432, %s431, 1
          %s434 = smul.addr %s433, 8
          %s435 = scalar_lea.vmem %s0, %s434
          %s436 = smul.u32 2, %s30
        $region16: #{tpu_custom_call.1} parent=11 // pred_fallthru
          _
        // Predicated region
        $region17: #{tpu_custom_call.1} parent=11 // pred_check
          %p437 = pneg %p366
        $region18: #{tpu_custom_call.1} parent=11 // pred_check_branch
          %439 = sbr.rel (%p437) target = $region20
        $region19: #{tpu_custom_call.1} parent=11 // pred_region
          _
        $region20: #{tpu_custom_call.1} parent=11 // pred_fallthru
          _
        // Predicated region
        $region21: #{tpu_custom_call.1} parent=11 // pred_check
          %p440 = pneg %p387
        $region22: #{tpu_custom_call.1} parent=11 // pred_check_branch
          %442 = sbr.rel (%p440) target = $region24
        $region23: #{tpu_custom_call.1} parent=11 // pred_region
          _
        $region24: #{tpu_custom_call.1} parent=11 // pred_fallthru
          _
      $region12: #{tpu_custom_call.1} parent=5 // pred_fallthru
        _
      %p443 = scmp.lt.s32.totalorder %s21, 2
      // Predicated region
      $region25: #{tpu_custom_call.1} parent=5 // pred_check
        %p444 = pneg %p443
      $region26: #{tpu_custom_call.1} parent=5 // pred_check_branch
        %446 = sbr.rel (%p444) target = $region28
      $region27: #{tpu_custom_call.1} parent=5 // pred_region
        // Predicated region
        $region29: #{tpu_custom_call.1} parent=27 // pred_check
          %p447 = pneg %p79
        $region30: #{tpu_custom_call.1} parent=27 // pred_check_branch
          %449 = sbr.rel (%p447) target = $region32
        $region31: #{tpu_custom_call.1} parent=27 // pred_region
          %p450 = scmp.lt.s32.totalorder %s29, 1
          %s451 = scalar_select %p450, %s29, 1
          %s452 = scalar_lea.vmem %s1, %s451
        $region32: #{tpu_custom_call.1} parent=27 // pred_fallthru
          _
        // Predicated region
        $region33: #{tpu_custom_call.1} parent=27 // pred_check
          %p453 = pneg %p105
        $region34: #{tpu_custom_call.1} parent=27 // pred_check_branch
          %455 = sbr.rel (%p453) target = $region36
        $region35: #{tpu_custom_call.1} parent=27 // pred_region
          %p456 = scmp.lt.s32.totalorder %s29, 1
          %s457 = scalar_select %p456, %s29, 1
          %s458 = scalar_lea.vmem %s2, %s457
        $region36: #{tpu_custom_call.1} parent=27 // pred_fallthru
          _
        // Predicated region
        $region37: #{tpu_custom_call.1} parent=27 // pred_check
          %p459 = pneg %p131
        $region38: #{tpu_custom_call.1} parent=27 // pred_check_branch
          %461 = sbr.rel (%p459) target = $region40
        $region39: #{tpu_custom_call.1} parent=27 // pred_region
          %p462 = scmp.lt.s32.totalorder %s29, 1
          %s463 = scalar_select %p462, %s29, 1
          %s464 = smul.addr %s463, 4
          %s465 = smul.addr %s464, 4
          %s466 = scalar_lea.vmem %s3, %s465
        $region40: #{tpu_custom_call.1} parent=27 // pred_fallthru
          _
        // Predicated region
        $region41: #{tpu_custom_call.1} parent=27 // pred_check
          %p467 = pneg %p157
        $region42: #{tpu_custom_call.1} parent=27 // pred_check_branch
          %469 = sbr.rel (%p467) target = $region44
        $region43: #{tpu_custom_call.1} parent=27 // pred_region
          %p470 = scmp.lt.s32.totalorder %s29, 1
          %s471 = scalar_select %p470, %s29, 1
          %s472 = smul.addr %s471, 4
          %s473 = smul.addr %s472, 4
          %s474 = scalar_lea.vmem %s4, %s473
        $region44: #{tpu_custom_call.1} parent=27 // pred_fallthru
          _
        // Predicated region
        $region45: #{tpu_custom_call.1} parent=27 // pred_check
          %p475 = pneg %p183
        $region46: #{tpu_custom_call.1} parent=27 // pred_check_branch
          %477 = sbr.rel (%p475) target = $region48
        $region47: #{tpu_custom_call.1} parent=27 // pred_region
          %p478 = scmp.lt.s32.totalorder %s29, 1
          %s479 = scalar_select %p478, %s29, 1
          %s480 = scalar_lea.vmem %s5, %s479
        $region48: #{tpu_custom_call.1} parent=27 // pred_fallthru
          _
        // Predicated region
        $region49: #{tpu_custom_call.1} parent=27 // pred_check
          %p481 = pneg %p209
        $region50: #{tpu_custom_call.1} parent=27 // pred_check_branch
          %483 = sbr.rel (%p481) target = $region52
        $region51: #{tpu_custom_call.1} parent=27 // pred_region
          %p484 = scmp.lt.s32.totalorder %s29, 1
          %s485 = scalar_select %p484, %s29, 1
          %s486 = scalar_lea.vmem %s6, %s485
        $region52: #{tpu_custom_call.1} parent=27 // pred_fallthru
          _
        // Predicated region
        $region53: #{tpu_custom_call.1} parent=27 // pred_check
          %p487 = pneg %p235
        $region54: #{tpu_custom_call.1} parent=27 // pred_check_branch
          %489 = sbr.rel (%p487) target = $region56
        $region55: #{tpu_custom_call.1} parent=27 // pred_region
          %p490 = scmp.lt.s32.totalorder %s29, 1
          %s491 = scalar_select %p490, %s29, 1
          %s492 = scalar_lea.vmem %s7, %s491
        $region56: #{tpu_custom_call.1} parent=27 // pred_fallthru
          _
        // Predicated region
        $region57: #{tpu_custom_call.1} parent=27 // pred_check
          %p493 = pneg %p261
        $region58: #{tpu_custom_call.1} parent=27 // pred_check_branch
          %495 = sbr.rel (%p493) target = $region60
        $region59: #{tpu_custom_call.1} parent=27 // pred_region
          %p496 = scmp.lt.s32.totalorder %s29, 1
          %s497 = scalar_select %p496, %s29, 1
          %s498 = smul.addr %s497, 4
          %s499 = smul.addr %s498, 4
          %s500 = scalar_lea.vmem %s8, %s499
        $region60: #{tpu_custom_call.1} parent=27 // pred_fallthru
          _
        // Predicated region
        $region61: #{tpu_custom_call.1} parent=27 // pred_check
          %p501 = pneg %p287
        $region62: #{tpu_custom_call.1} parent=27 // pred_check_branch
          %503 = sbr.rel (%p501) target = $region64
        $region63: #{tpu_custom_call.1} parent=27 // pred_region
          %p504 = scmp.lt.s32.totalorder %s29, 1
          %s505 = scalar_select %p504, %s29, 1
          %s506 = scalar_lea.vmem %s9, %s505
        $region64: #{tpu_custom_call.1} parent=27 // pred_fallthru
          _
        // Predicated region
        $region65: #{tpu_custom_call.1} parent=27 // pred_check
          %p507 = pneg %p313
        $region66: #{tpu_custom_call.1} parent=27 // pred_check_branch
          %509 = sbr.rel (%p507) target = $region68
        $region67: #{tpu_custom_call.1} parent=27 // pred_region
          %p510 = scmp.lt.s32.totalorder %s29, 1
          %s511 = scalar_select %p510, %s29, 1
          %s512 = smul.addr %s511, 16
          %s513 = smul.addr %s512, 4
          %s514 = scalar_lea.vmem %s10, %s513
        $region68: #{tpu_custom_call.1} parent=27 // pred_fallthru
          _
        // Predicated region
        $region69: #{tpu_custom_call.1} parent=27 // pred_check
          %p515 = pneg %p339
        $region70: #{tpu_custom_call.1} parent=27 // pred_check_branch
          %517 = sbr.rel (%p515) target = $region72
        $region71: #{tpu_custom_call.1} parent=27 // pred_region
          %p518 = scmp.lt.s32.totalorder %s29, 1
          %s519 = scalar_select %p518, %s29, 1
          %s520 = scalar_lea.vmem %s11, %s519
        $region72: #{tpu_custom_call.1} parent=27 // pred_fallthru
          _
      $region28: #{tpu_custom_call.1} parent=5 // pred_fallthru
        _
      %p521 = scmp.le.s32.totalorder 1, %s21
      %p522 = scmp.lt.s32.totalorder %s21, 3
      %p523 = pnand %p521, %p522
      %p524 = pneg %p523
      // Predicated region
      $region73: #{tpu_custom_call.1} parent=5 // pred_check
        _
      $region74: #{tpu_custom_call.1} parent=5 // pred_check_branch
        %526 = sbr.rel (%p523) target = $region76
      $region75: #{tpu_custom_call.1} parent=5 // pred_region
        %s527 = ssub.s32 %s21, 1
        %s528 = smul.u32 2, %s30
        %p529 = scmp.lt.s32.totalorder %s528, 1
        %s530 = scalar_select %p529, %s528, 1
        %s531 = smul.addr %s530, 8
        %s532 = scalar_lea.vmem %s0, %s531
        %p533 = pneg %p59
        %p534 = pneg %p56
        %p535 = scmp.lt.s32.totalorder %s31, 1
        %s536 = scalar_select %p535, %s31, 1
        %s537 = scalar_lea.vmem %s1, %s536
        %p538 = pneg %p85
        %p539 = pneg %p82
        %p540 = scmp.lt.s32.totalorder %s31, 1
        %s541 = scalar_select %p540, %s31, 1
        %s542 = scalar_lea.vmem %s2, %s541
        %p543 = pneg %p111
        %p544 = pneg %p108
        %p545 = scmp.lt.s32.totalorder %s31, 1
        %s546 = scalar_select %p545, %s31, 1
        %s547 = smul.addr %s546, 4
        %s548 = smul.addr %s547, 4
        %s549 = scalar_lea.vmem %s3, %s548
        %p550 = pneg %p137
        %p551 = pneg %p134
        %p552 = scmp.lt.s32.totalorder %s31, 1
        %s553 = scalar_select %p552, %s31, 1
        %s554 = smul.addr %s553, 4
        %s555 = smul.addr %s554, 4
        %s556 = scalar_lea.vmem %s4, %s555
        %p557 = pneg %p163
        %p558 = pneg %p160
        %p559 = scmp.lt.s32.totalorder %s31, 1
        %s560 = scalar_select %p559, %s31, 1
        %s561 = scalar_lea.vmem %s5, %s560
        %p562 = pneg %p189
        %p563 = pneg %p186
        %p564 = scmp.lt.s32.totalorder %s31, 1
        %s565 = scalar_select %p564, %s31, 1
        %s566 = scalar_lea.vmem %s6, %s565
        %p567 = pneg %p215
        %p568 = pneg %p212
        %p569 = scmp.lt.s32.totalorder %s31, 1
        %s570 = scalar_select %p569, %s31, 1
        %s571 = scalar_lea.vmem %s7, %s570
        %p572 = pneg %p241
        %p573 = pneg %p238
        %p574 = scmp.lt.s32.totalorder %s31, 1
        %s575 = scalar_select %p574, %s31, 1
        %s576 = smul.addr %s575, 4
        %s577 = smul.addr %s576, 4
        %s578 = scalar_lea.vmem %s8, %s577
        %p579 = pneg %p267
        %p580 = pneg %p264
        %p581 = scmp.lt.s32.totalorder %s31, 1
        %s582 = scalar_select %p581, %s31, 1
        %s583 = scalar_lea.vmem %s9, %s582
        %p584 = pneg %p293
        %p585 = pneg %p290
        %p586 = scmp.lt.s32.totalorder %s31, 1
        %s587 = scalar_select %p586, %s31, 1
        %s588 = smul.addr %s587, 16
        %s589 = smul.addr %s588, 4
        %s590 = scalar_lea.vmem %s10, %s589
        %p591 = pneg %p319
        %p592 = pneg %p316
        %p593 = scmp.lt.s32.totalorder %s31, 1
        %s594 = scalar_select %p593, %s31, 1
        %s595 = scalar_lea.vmem %s11, %s594
        %p596 = pneg %p345
        %p597 = pneg %p342
        %p598 = pneg %p366
        %p599 = pneg %p363
        %p600 = pneg %p387
        %p601 = pneg %p384
        %p602 = pneg %p413
        %p603 = pneg %p410
        %s604 = smul.u32 2, %s30
        %p605 = scmp.lt.s32.totalorder %s604, 1
        %s606 = scalar_select %p605, %s604, 1
        %s607 = smul.addr %s606, 8
        %s608 = scalar_lea.vmem %s0, %s607
        %s609 = smul.u32 2, %s30
        %p610 = scmp.lt.s32.totalorder %s31, 1
        %s611 = scalar_select %p610, %s31, 1
        %s612 = scalar_lea.vmem %s1, %s611
        %p613 = scmp.lt.s32.totalorder %s31, 1
        %s614 = scalar_select %p613, %s31, 1
        %s615 = scalar_lea.vmem %s2, %s614
        %p616 = scmp.lt.s32.totalorder %s31, 1
        %s617 = scalar_select %p616, %s31, 1
        %s618 = smul.addr %s617, 4
        %s619 = smul.addr %s618, 4
        %s620 = scalar_lea.vmem %s3, %s619
        %p621 = scmp.lt.s32.totalorder %s31, 1
        %s622 = scalar_select %p621, %s31, 1
        %s623 = smul.addr %s622, 4
        %s624 = smul.addr %s623, 4
        %s625 = scalar_lea.vmem %s4, %s624
        %p626 = scmp.lt.s32.totalorder %s31, 1
        %s627 = scalar_select %p626, %s31, 1
        %s628 = scalar_lea.vmem %s5, %s627
        %p629 = scmp.lt.s32.totalorder %s31, 1
        %s630 = scalar_select %p629, %s31, 1
        %s631 = scalar_lea.vmem %s6, %s630
        %p632 = scmp.lt.s32.totalorder %s31, 1
        %s633 = scalar_select %p632, %s31, 1
        %s634 = scalar_lea.vmem %s7, %s633
        %p635 = scmp.lt.s32.totalorder %s31, 1
        %s636 = scalar_select %p635, %s31, 1
        %s637 = smul.addr %s636, 4
        %s638 = smul.addr %s637, 4
        %s639 = scalar_lea.vmem %s8, %s638
        %p640 = scmp.lt.s32.totalorder %s31, 1
        %s641 = scalar_select %p640, %s31, 1
        %s642 = scalar_lea.vmem %s9, %s641
        %p643 = scmp.lt.s32.totalorder %s31, 1
        %s644 = scalar_select %p643, %s31, 1
        %s645 = smul.addr %s644, 16
        %s646 = smul.addr %s645, 4
        %s647 = scalar_lea.vmem %s10, %s646
        %p648 = scmp.lt.s32.totalorder %s31, 1
        %s649 = scalar_select %p648, %s31, 1
        %s650 = scalar_lea.vmem %s11, %s649
        %s651 = smul.u32 2, %s30
        %p653 = scmp.eq.s32.totalorder %s31, 0
        // Predicated region
        $region77: #{tpu_custom_call.1} parent=75 // pred_check
          %p654 = pneg %p653
        $region78: #{tpu_custom_call.1} parent=75 // pred_check_branch
          %656 = sbr.rel (%p654) target = $region80
        $region79: #{tpu_custom_call.1} parent=75 // pred_region
          %v657 = vld [vmem:[%s608] sm:$0xff]
          %v658 = vld [vmem:[%s608 + $0x8] sm:$0xff]
          %vm659 = vcmask 261120
          %660 = vst.msk [vmem:[#allocation2] sm:$0xff] %vm659, %v657
          %661 = vst.msk [vmem:[#allocation2 + $0x8] sm:$0xff] %vm659, %v658
        $region80: #{tpu_custom_call.1} parent=75 // pred_fallthru
          _
        %v662 = vld [vmem:[#allocation2] sm:$0xff]
        %v663 = vld [vmem:[#allocation2 + $0x8] sm:$0xff]
        %v664 = vld [vmem:[%s612] sm:$0x1]
        %v665 = vld [vmem:[%s615] sm:$0x1]
        %vm666 = vcmask 261120
        %v667 = vsel %vm666, %v662, 0.0
        %668 = vadd.xlane.f32.xlu0 %v667
        %v669 = vpop.xlane.xlu0 %668
        %v670 = vsel %vm666, %v663, 0.0
        %671 = vadd.xlane.f32.xlu0 %v670
        %v672 = vpop.xlane.xlu0 %671
        %v673 = vrcp.pop 32.0
        %v674 = vmul.f32 32.0, %v673
        %v675 = vsub.f32 1.0, %v674
        %v676 = vmul.f32 %v673, %v675
        %v677 = vadd.f32 %v673, %v676
        %vm678 = vweird.f32 %v673
        %v679 = vsel %vm678, %v673, %v677
        %v680 = vmul.f32 %v669, %v679
        %v681 = vmul.f32 %v672, %v679
        %v682 = vsub.f32 %v662, %v680
        %v683 = vsub.f32 %v663, %v681
        %v684 = vmul.f32 %v682, %v682
        %v685 = vmul.f32 %v683, %v683
        %v686 = vsel %vm666, %v684, 0.0
        %687 = vadd.xlane.f32.xlu0 %v686
        %v688 = vpop.xlane.xlu0 %687
        %v689 = vsel %vm666, %v685, 0.0
        %690 = vadd.xlane.f32.xlu0 %v689
        %v691 = vpop.xlane.xlu0 %690
        %v692 = vmul.f32 %v688, %v679
        %v693 = vmul.f32 %v691, %v679
        %v694 = vadd.f32 %v692, 1e-05
        %v695 = vadd.f32 %v693, 1e-05
        %v696 = vrsqrt.pop %v694
        %v697 = vmul.f32 %v696, %v694
        %v698 = vmul.f32 %v697, %v696
        %v699 = vmul.f32 0.5, %v698
        %v700 = vsub.f32 1.5, %v699
        %v701 = vmul.f32 %v696, %v700
        %vm702 = vweird.f32 %v694
        %vm703 = vweird.f32 %v696
        %vm704 = vmor %vm702, %vm703
        %v705 = vsel %vm704, %v696, %v701
        %v706 = vrsqrt.pop %v695
        %v707 = vmul.f32 %v706, %v695
        %v708 = vmul.f32 %v707, %v706
        %v709 = vmul.f32 0.5, %v708
        %v710 = vsub.f32 1.5, %v709
        %v711 = vmul.f32 %v706, %v710
        %vm712 = vweird.f32 %v695
        %vm713 = vweird.f32 %v706
        %vm714 = vmor %vm712, %vm713
        %v715 = vsel %vm714, %v706, %v711
        %v716 = vmul.f32 %v682, %v705
        %v717 = vmul.f32 %v683, %v715
        %v719 = vperm.slane %v664, 0
        %v721 = vmul.f32 %v716, %v719
        %v722 = vmul.f32 %v717, %v719
        %v724 = vperm.slane %v665, 0
        %v726 = vadd.f32 %v721, %v724
        %v727 = vadd.f32 %v722, %v724
        %v728 = vpack.c.bf16 %v727, %v726
        %v729 = vld [vmem:[%s620] sm:$0xf]
        %v730 = vld [vmem:[%s620 + $0x4] sm:$0xf]
        %v731 = vld [vmem:[%s620 + $0x8] sm:$0xf]
        %v732 = vld [vmem:[%s620 + $0xc] sm:$0xf]
        %v737 = vunpack.c.l.b16 %v729
        %v738 = vunpack.c.l.b16 %v730
        %v739 = vunpack.c.l.b16 %v731
        %v740 = vunpack.c.l.b16 %v732
        %v741 = vpack.c.b16 %v738, %v737
        %v742 = vpack.c.b16 %v740, %v739
        %v746 = vsel %vm666, %v728, 0
        %748 = vmatpush.bf16.msra.mxu0 0
        %749 = vmatpush.bf16.msra.mxu0 0
        %750 = vmatpush.bf16.msra.mxu0 0
        %751 = vmatpush.bf16.msra.mxu0 0
        %752 = vmatpush.bf16.msra.mxu0 0
        %753 = vmatpush.bf16.msra.mxu0 0
        %754 = vmatpush.bf16.msra.mxu0 %v742
        %755 = vmatpush.bf16.msra.mxu0 %v741
        %756 = vmatmul.bf16.gmra.mxu0 %v746
        %v757 = vpop.f32.mrf.mxu0
        %v758 = vadd.f32 0.0, %v757
        %v759 = vpop.f32.mrf.mxu0
        %v760 = vadd.f32 0.0, %v759
        %761 = vdwg.mxu0
        %v762 = vpack.c.bf16 %v758, %v758
        %v763 = vpack.c.bf16 %v760, %v760
        %765 = vrot.lane.b32.xlu0 %v762, 120
        %v766 = vpop.permute.xlu0 %765
        %767 = vrot.lane.b32.xlu0 %v762, 112
        %v768 = vpop.permute.xlu0 %767
        %769 = vrot.lane.b32.xlu0 %v762, 104
        %v770 = vpop.permute.xlu0 %769
        %v773 = vpack.i.b16 %v766, %v762
        %v774 = vshrl.u32 %v762, 16
        %v775 = vshrl.u32 %v766, 16
        %v776 = vpack.i.b16 %v775, %v774
        %v779 = vpack.i.b16 %v770, %v768
        %v780 = vshrl.u32 %v768, 16
        %v781 = vshrl.u32 %v770, 16
        %v782 = vpack.i.b16 %v781, %v780
        %v785 = vunpack.c.l.s4 1983009808
        %v786 = vunpack.c.0.s8 %v785
        %v787 = vperm.slane %v773, %v786
        %v790 = vunpack.c.l.s4 1983009808
        %v791 = vunpack.c.0.s8 %v790
        %v792 = vperm.slane %v779, %v791
        %v793 = vrot.slane %v792, 4
        %vm794 = vcmask 1047556
        %v795 = vsel %vm794, %v793, %v787
        %v796 = vrot.slane %v787, 4
        %v797 = vsel %vm794, %v792, %v796
        %v799 = vunpack.c.l.s4 1934713408
        %v800 = vunpack.c.0.s8 %v799
        %v801 = vperm.slane %v795, %v800
        %v803 = vunpack.c.l.s4 1934713408
        %v804 = vunpack.c.0.s8 %v803
        %v805 = vperm.slane %v797, %v804
        %v806 = vrot.slane %v801, 4
        %v807 = vsel %vm794, 0, %v806
        %v808 = vrot.slane %v805, 4
        %v809 = vsel %vm794, 0, %v808
        %v812 = vunpack.c.l.s4 1983009808
        %v813 = vunpack.c.0.s8 %v812
        %v814 = vperm.slane %v776, %v813
        %v817 = vunpack.c.l.s4 1983009808
        %v818 = vunpack.c.0.s8 %v817
        %v819 = vperm.slane %v782, %v818
        %v820 = vrot.slane %v819, 4
        %v821 = vsel %vm794, %v820, %v814
        %v822 = vrot.slane %v814, 4
        %v823 = vsel %vm794, %v819, %v822
        %v825 = vunpack.c.l.s4 1934713408
        %v826 = vunpack.c.0.s8 %v825
        %v827 = vperm.slane %v821, %v826
        %v829 = vunpack.c.l.s4 1934713408
        %v830 = vunpack.c.0.s8 %v829
        %v831 = vperm.slane %v823, %v830
        %v832 = vrot.slane %v827, 4
        %v833 = vsel %vm794, 0, %v832
        %v834 = vrot.slane %v831, 4
        %v835 = vsel %vm794, 0, %v834
        %v836 = vsel %vm794, %v808, %v801
        %v838 = vunpack.c.l.s4 1983009808
        %v839 = vunpack.c.0.s8 %v838
        %v840 = vperm.slane %v836, %v839
        %v841 = vrot.slane %v809, 4
        %v842 = vsel %vm794, %v841, %v807
        %v844 = vunpack.c.l.s4 1983009808
        %v845 = vunpack.c.0.s8 %v844
        %v846 = vperm.slane %v842, %v845
        %v847 = vrot.slane %v846, 4
        %v848 = vsel %vm794, %v847, %v840
        %v850 = vunpack.c.l.s4 1934713408
        %v851 = vunpack.c.0.s8 %v850
        %v852 = vperm.slane %v848, %v851
        %v853 = vrot.slane %v852, 4
        %v854 = vsel %vm794, 0, %v853
        %v855 = vsel %vm794, %v834, %v827
        %v857 = vunpack.c.l.s4 1983009808
        %v858 = vunpack.c.0.s8 %v857
        %v859 = vperm.slane %v855, %v858
        %v860 = vrot.slane %v835, 4
        %v861 = vsel %vm794, %v860, %v833
        %v863 = vunpack.c.l.s4 1983009808
        %v864 = vunpack.c.0.s8 %v863
        %v865 = vperm.slane %v861, %v864
        %v866 = vrot.slane %v865, 4
        %v867 = vsel %vm794, %v866, %v859
        %v869 = vunpack.c.l.s4 1934713408
        %v870 = vunpack.c.0.s8 %v869
        %v871 = vperm.slane %v867, %v870
        %v872 = vrot.slane %v871, 4
        %v873 = vsel %vm794, 0, %v872
        %v876 = vpack.i.b16 %v871, %v852
        %v877 = vshrl.u32 %v852, 16
        %v878 = vshrl.u32 %v871, 16
        %v879 = vpack.i.b16 %v878, %v877
        %v882 = vpack.i.b16 %v873, %v854
        %v883 = vshrl.u32 %v854, 16
        %v884 = vshrl.u32 %v873, 16
        %v885 = vpack.i.b16 %v884, %v883
        %886 = vrot.lane.b32.xlu0 %v762, 96
        %v887 = vpop.permute.xlu0 %886
        %888 = vrot.lane.b32.xlu0 %v766, 96
        %v889 = vpop.permute.xlu0 %888
        %890 = vrot.lane.b32.xlu0 %v768, 96
        %v891 = vpop.permute.xlu0 %890
        %892 = vrot.lane.b32.xlu0 %v770, 96
        %v893 = vpop.permute.xlu0 %892
        %v896 = vpack.i.b16 %v889, %v887
        %v897 = vshrl.u32 %v887, 16
        %v898 = vshrl.u32 %v889, 16
        %v899 = vpack.i.b16 %v898, %v897
        %v902 = vpack.i.b16 %v893, %v891
        %v903 = vshrl.u32 %v891, 16
        %v904 = vshrl.u32 %v893, 16
        %v905 = vpack.i.b16 %v904, %v903
        %v908 = vunpack.c.l.s4 1983009808
        %v909 = vunpack.c.0.s8 %v908
        %v910 = vperm.slane %v896, %v909
        %v913 = vunpack.c.l.s4 1983009808
        %v914 = vunpack.c.0.s8 %v913
        %v915 = vperm.slane %v902, %v914
        %v916 = vrot.slane %v915, 4
        %v917 = vsel %vm794, %v916, %v910
        %v918 = vrot.slane %v910, 4
        %v919 = vsel %vm794, %v915, %v918
        %v921 = vunpack.c.l.s4 1934713408
        %v922 = vunpack.c.0.s8 %v921
        %v923 = vperm.slane %v917, %v922
        %v925 = vunpack.c.l.s4 1934713408
        %v926 = vunpack.c.0.s8 %v925
        %v927 = vperm.slane %v919, %v926
        %v928 = vrot.slane %v923, 4
        %v929 = vsel %vm794, 0, %v928
        %v930 = vrot.slane %v927, 4
        %v931 = vsel %vm794, 0, %v930
        %v934 = vunpack.c.l.s4 1983009808
        %v935 = vunpack.c.0.s8 %v934
        %v936 = vperm.slane %v899, %v935
        %v939 = vunpack.c.l.s4 1983009808
        %v940 = vunpack.c.0.s8 %v939
        %v941 = vperm.slane %v905, %v940
        %v942 = vrot.slane %v941, 4
        %v943 = vsel %vm794, %v942, %v936
        %v944 = vrot.slane %v936, 4
        %v945 = vsel %vm794, %v941, %v944
        %v947 = vunpack.c.l.s4 1934713408
        %v948 = vunpack.c.0.s8 %v947
        %v949 = vperm.slane %v943, %v948
        %v951 = vunpack.c.l.s4 1934713408
        %v952 = vunpack.c.0.s8 %v951
        %v953 = vperm.slane %v945, %v952
        %v954 = vrot.slane %v949, 4
        %v955 = vsel %vm794, 0, %v954
        %v956 = vrot.slane %v953, 4
        %v957 = vsel %vm794, 0, %v956
        %v958 = vsel %vm794, %v930, %v923
        %v960 = vunpack.c.l.s4 1983009808
        %v961 = vunpack.c.0.s8 %v960
        %v962 = vperm.slane %v958, %v961
        %v963 = vrot.slane %v931, 4
        %v964 = vsel %vm794, %v963, %v929
        %v966 = vunpack.c.l.s4 1983009808
        %v967 = vunpack.c.0.s8 %v966
        %v968 = vperm.slane %v964, %v967
        %v969 = vrot.slane %v968, 4
        %v970 = vsel %vm794, %v969, %v962
        %v972 = vunpack.c.l.s4 1934713408
        %v973 = vunpack.c.0.s8 %v972
        %v974 = vperm.slane %v970, %v973
        %v975 = vrot.slane %v974, 4
        %v976 = vsel %vm794, 0, %v975
        %v977 = vsel %vm794, %v956, %v949
        %v979 = vunpack.c.l.s4 1983009808
        %v980 = vunpack.c.0.s8 %v979
        %v981 = vperm.slane %v977, %v980
        %v982 = vrot.slane %v957, 4
        %v983 = vsel %vm794, %v982, %v955
        %v985 = vunpack.c.l.s4 1983009808
        %v986 = vunpack.c.0.s8 %v985
        %v987 = vperm.slane %v983, %v986
        %v988 = vrot.slane %v987, 4
        %v989 = vsel %vm794, %v988, %v981
        %v991 = vunpack.c.l.s4 1934713408
        %v992 = vunpack.c.0.s8 %v991
        %v993 = vperm.slane %v989, %v992
        %v994 = vrot.slane %v993, 4
        %v995 = vsel %vm794, 0, %v994
        %v998 = vpack.i.b16 %v993, %v974
        %v999 = vshrl.u32 %v974, 16
        %v1000 = vshrl.u32 %v993, 16
        %v1001 = vpack.i.b16 %v1000, %v999
        %v1004 = vpack.i.b16 %v995, %v976
        %v1005 = vshrl.u32 %v976, 16
        %v1006 = vshrl.u32 %v995, 16
        %v1007 = vpack.i.b16 %v1006, %v1005
        %1008 = vrot.lane.b32.xlu0 %v762, 64
        %v1009 = vpop.permute.xlu0 %1008
        %1010 = vrot.lane.b32.xlu0 %v766, 64
        %v1011 = vpop.permute.xlu0 %1010
        %1012 = vrot.lane.b32.xlu0 %v768, 64
        %v1013 = vpop.permute.xlu0 %1012
        %1014 = vrot.lane.b32.xlu0 %v770, 64
        %v1015 = vpop.permute.xlu0 %1014
        %v1018 = vpack.i.b16 %v1011, %v1009
        %v1019 = vshrl.u32 %v1009, 16
        %v1020 = vshrl.u32 %v1011, 16
        %v1021 = vpack.i.b16 %v1020, %v1019
        %v1024 = vpack.i.b16 %v1015, %v1013
        %v1025 = vshrl.u32 %v1013, 16
        %v1026 = vshrl.u32 %v1015, 16
        %v1027 = vpack.i.b16 %v1026, %v1025
        %v1030 = vunpack.c.l.s4 1983009808
        %v1031 = vunpack.c.0.s8 %v1030
        %v1032 = vperm.slane %v1018, %v1031
        %v1035 = vunpack.c.l.s4 1983009808
        %v1036 = vunpack.c.0.s8 %v1035
        %v1037 = vperm.slane %v1024, %v1036
        %v1038 = vrot.slane %v1037, 4
        %v1039 = vsel %vm794, %v1038, %v1032
        %v1040 = vrot.slane %v1032, 4
        %v1041 = vsel %vm794, %v1037, %v1040
        %v1043 = vunpack.c.l.s4 1934713408
        %v1044 = vunpack.c.0.s8 %v1043
        %v1045 = vperm.slane %v1039, %v1044
        %v1047 = vunpack.c.l.s4 1934713408
        %v1048 = vunpack.c.0.s8 %v1047
        %v1049 = vperm.slane %v1041, %v1048
        %v1050 = vrot.slane %v1045, 4
        %v1051 = vsel %vm794, 0, %v1050
        %v1052 = vrot.slane %v1049, 4
        %v1053 = vsel %vm794, 0, %v1052
        %v1056 = vunpack.c.l.s4 1983009808
        %v1057 = vunpack.c.0.s8 %v1056
        %v1058 = vperm.slane %v1021, %v1057
        %v1061 = vunpack.c.l.s4 1983009808
        %v1062 = vunpack.c.0.s8 %v1061
        %v1063 = vperm.slane %v1027, %v1062
        %v1064 = vrot.slane %v1063, 4
        %v1065 = vsel %vm794, %v1064, %v1058
        %v1066 = vrot.slane %v1058, 4
        %v1067 = vsel %vm794, %v1063, %v1066
        %v1069 = vunpack.c.l.s4 1934713408
        %v1070 = vunpack.c.0.s8 %v1069
        %v1071 = vperm.slane %v1065, %v1070
        %v1073 = vunpack.c.l.s4 1934713408
        %v1074 = vunpack.c.0.s8 %v1073
        %v1075 = vperm.slane %v1067, %v1074
        %v1076 = vrot.slane %v1071, 4
        %v1077 = vsel %vm794, 0, %v1076
        %v1078 = vrot.slane %v1075, 4
        %v1079 = vsel %vm794, 0, %v1078
        %v1080 = vsel %vm794, %v1052, %v1045
        %v1082 = vunpack.c.l.s4 1983009808
        %v1083 = vunpack.c.0.s8 %v1082
        %v1084 = vperm.slane %v1080, %v1083
        %v1085 = vrot.slane %v1053, 4
        %v1086 = vsel %vm794, %v1085, %v1051
        %v1088 = vunpack.c.l.s4 1983009808
        %v1089 = vunpack.c.0.s8 %v1088
        %v1090 = vperm.slane %v1086, %v1089
        %v1091 = vrot.slane %v1090, 4
        %v1092 = vsel %vm794, %v1091, %v1084
        %v1094 = vunpack.c.l.s4 1934713408
        %v1095 = vunpack.c.0.s8 %v1094
        %v1096 = vperm.slane %v1092, %v1095
        %v1097 = vrot.slane %v1096, 4
        %v1098 = vsel %vm794, 0, %v1097
        %v1099 = vsel %vm794, %v1078, %v1071
        %v1101 = vunpack.c.l.s4 1983009808
        %v1102 = vunpack.c.0.s8 %v1101
        %v1103 = vperm.slane %v1099, %v1102
        %v1104 = vrot.slane %v1079, 4
        %v1105 = vsel %vm794, %v1104, %v1077
        %v1107 = vunpack.c.l.s4 1983009808
        %v1108 = vunpack.c.0.s8 %v1107
        %v1109 = vperm.slane %v1105, %v1108
        %v1110 = vrot.slane %v1109, 4
        %v1111 = vsel %vm794, %v1110, %v1103
        %v1113 = vunpack.c.l.s4 1934713408
        %v1114 = vunpack.c.0.s8 %v1113
        %v1115 = vperm.slane %v1111, %v1114
        %v1116 = vrot.slane %v1115, 4
        %v1117 = vsel %vm794, 0, %v1116
        %v1120 = vpack.i.b16 %v1115, %v1096
        %v1121 = vshrl.u32 %v1096, 16
        %v1122 = vshrl.u32 %v1115, 16
        %v1123 = vpack.i.b16 %v1122, %v1121
        %v1126 = vpack.i.b16 %v1117, %v1098
        %v1127 = vshrl.u32 %v1098, 16
        %v1128 = vshrl.u32 %v1117, 16
        %v1129 = vpack.i.b16 %v1128, %v1127
        %vm1130 = vcmask 64512
        %v1132 = vsel %vm1130, %v876, 0
        %v1135 = vsel %vm1130, %v998, 0
        %1137 = vmatpush.bf16.xpose.msra.mxu0 0
        %1138 = vmatpush.bf16.xpose.msra.mxu0 0
        %1139 = vmatpush.bf16.xpose.msra.mxu0 0
        %1140 = vmatpush.bf16.xpose.msra.mxu0 0
        %1141 = vmatpush.bf16.xpose.msra.mxu0 0
        %1142 = vmatpush.bf16.xpose.msra.mxu0 0
        %1143 = vmatpush.bf16.xpose.msra.mxu0 0
        %1144 = vmatpush.bf16.xpose.msra.mxu0 %v1135
        %1145 = vmatmul.bf16.gmra.mxu0 %v1132
        %v1146 = vpop.f32.mrf.mxu0
        %v1147 = vadd.f32 0.0, %v1146
        %v1148 = vpop.f32.mrf.mxu0
        %1149 = vdwg.mxu0
        %v1151 = vsel %vm1130, %v879, 0
        %v1154 = vsel %vm1130, %v1001, 0
        %1156 = vmatpush.bf16.xpose.msra.mxu0 0
        %1157 = vmatpush.bf16.xpose.msra.mxu0 0
        %1158 = vmatpush.bf16.xpose.msra.mxu0 0
        %1159 = vmatpush.bf16.xpose.msra.mxu0 0
        %1160 = vmatpush.bf16.xpose.msra.mxu0 0
        %1161 = vmatpush.bf16.xpose.msra.mxu0 0
        %1162 = vmatpush.bf16.xpose.msra.mxu0 0
        %1163 = vmatpush.bf16.xpose.msra.mxu0 %v1154
        %1164 = vmatmul.bf16.gmra.mxu0 %v1151
        %v1165 = vpop.f32.mrf.mxu0
        %v1166 = vadd.f32 0.0, %v1165
        %v1167 = vpop.f32.mrf.mxu0
        %1168 = vdwg.mxu0
        %v1170 = vsel %vm1130, %v882, 0
        %v1173 = vsel %vm1130, %v1004, 0
        %1175 = vmatpush.bf16.xpose.msra.mxu0 0
        %1176 = vmatpush.bf16.xpose.msra.mxu0 0
        %1177 = vmatpush.bf16.xpose.msra.mxu0 0
        %1178 = vmatpush.bf16.xpose.msra.mxu0 0
        %1179 = vmatpush.bf16.xpose.msra.mxu0 0
        %1180 = vmatpush.bf16.xpose.msra.mxu0 0
        %1181 = vmatpush.bf16.xpose.msra.mxu0 0
        %1182 = vmatpush.bf16.xpose.msra.mxu0 %v1173
        %1183 = vmatmul.bf16.gmra.mxu0 %v1170
        %v1184 = vpop.f32.mrf.mxu0
        %v1185 = vadd.f32 0.0, %v1184
        %v1186 = vpop.f32.mrf.mxu0
        %1187 = vdwg.mxu0
        %v1189 = vsel %vm1130, %v885, 0
        %v1192 = vsel %vm1130, %v1007, 0
        %1194 = vmatpush.bf16.xpose.msra.mxu0 0
        %1195 = vmatpush.bf16.xpose.msra.mxu0 0
        %1196 = vmatpush.bf16.xpose.msra.mxu0 0
        %1197 = vmatpush.bf16.xpose.msra.mxu0 0
        %1198 = vmatpush.bf16.xpose.msra.mxu0 0
        %1199 = vmatpush.bf16.xpose.msra.mxu0 0
        %1200 = vmatpush.bf16.xpose.msra.mxu0 0
        %1201 = vmatpush.bf16.xpose.msra.mxu0 %v1192
        %1202 = vmatmul.bf16.gmra.mxu0 %v1189
        %v1203 = vpop.f32.mrf.mxu0
        %v1204 = vadd.f32 0.0, %v1203
        %v1205 = vpop.f32.mrf.mxu0
        %1206 = vdwg.mxu0
        %v1207 = vsel %vm1130, %v1147, -inf
        %1208 = vmax.xlane.f32.xlu0 %v1207
        %v1209 = vpop.xlane.xlu0 %1208
        %v1210 = vsel %vm1130, %v1166, -inf
        %1211 = vmax.xlane.f32.xlu0 %v1210
        %v1212 = vpop.xlane.xlu0 %1211
        %v1213 = vsel %vm1130, %v1185, -inf
        %1214 = vmax.xlane.f32.xlu0 %v1213
        %v1215 = vpop.xlane.xlu0 %1214
        %v1216 = vsel %vm1130, %v1204, -inf
        %1217 = vmax.xlane.f32.xlu0 %v1216
        %v1218 = vpop.xlane.xlu0 %1217
        %v1219 = vsub.f32 %v1147, %v1209
        %v1220 = vsub.f32 %v1166, %v1212
        %v1221 = vsub.f32 %v1185, %v1215
        %v1222 = vsub.f32 %v1204, %v1218
        %v1223 = vmul.f32 %v1219, 1.442695
        %v1224 = vpow.pop %v1223
        %v1225 = vmul.f32 %v1220, 1.442695
        %v1226 = vpow.pop %v1225
        %v1227 = vmul.f32 %v1221, 1.442695
        %v1228 = vpow.pop %v1227
        %v1229 = vmul.f32 %v1222, 1.442695
        %v1230 = vpow.pop %v1229
        %v1231 = vsel %vm1130, %v1224, 0.0
        %1232 = vadd.xlane.f32.xlu0 %v1231
        %v1233 = vpop.xlane.xlu0 %1232
        %v1234 = vsel %vm1130, %v1226, 0.0
        %1235 = vadd.xlane.f32.xlu0 %v1234
        %v1236 = vpop.xlane.xlu0 %1235
        %v1237 = vsel %vm1130, %v1228, 0.0
        %1238 = vadd.xlane.f32.xlu0 %v1237
        %v1239 = vpop.xlane.xlu0 %1238
        %v1240 = vsel %vm1130, %v1230, 0.0
        %1241 = vadd.xlane.f32.xlu0 %v1240
        %v1242 = vpop.xlane.xlu0 %1241
        %v1243 = vrcp.pop %v1233
        %v1244 = vmul.f32 %v1233, %v1243
        %v1245 = vsub.f32 1.0, %v1244
        %v1246 = vmul.f32 %v1243, %v1245
        %v1247 = vadd.f32 %v1243, %v1246
        %vm1248 = vweird.f32 %v1233
        %vm1249 = vweird.f32 %v1243
        %vm1250 = vmor %vm1248, %vm1249
        %v1251 = vsel %vm1250, %v1243, %v1247
        %v1252 = vand.u32 2147483647, %v1233
        %vm1253 = vcmp.eq.f32.partialorder %v1252, 8.507059e+37
        %v1254 = vand.u32 %v1233, 2147483648
        %v1255 = vor.u32 1.1754944e-38, %v1254
        %v1256 = vsel %vm1253, %v1255, %v1251
        %v1257 = vmul.f32 1.0, %v1256
        %v1258 = vrcp.pop %v1236
        %v1259 = vmul.f32 %v1236, %v1258
        %v1260 = vsub.f32 1.0, %v1259
        %v1261 = vmul.f32 %v1258, %v1260
        %v1262 = vadd.f32 %v1258, %v1261
        %vm1263 = vweird.f32 %v1236
        %vm1264 = vweird.f32 %v1258
        %vm1265 = vmor %vm1263, %vm1264
        %v1266 = vsel %vm1265, %v1258, %v1262
        %v1267 = vand.u32 2147483647, %v1236
        %vm1268 = vcmp.eq.f32.partialorder %v1267, 8.507059e+37
        %v1269 = vand.u32 %v1236, 2147483648
        %v1270 = vor.u32 1.1754944e-38, %v1269
        %v1271 = vsel %vm1268, %v1270, %v1266
        %v1272 = vmul.f32 1.0, %v1271
        %v1273 = vrcp.pop %v1239
        %v1274 = vmul.f32 %v1239, %v1273
        %v1275 = vsub.f32 1.0, %v1274
        %v1276 = vmul.f32 %v1273, %v1275
        %v1277 = vadd.f32 %v1273, %v1276
        %vm1278 = vweird.f32 %v1239
        %vm1279 = vweird.f32 %v1273
        %vm1280 = vmor %vm1278, %vm1279
        %v1281 = vsel %vm1280, %v1273, %v1277
        %v1282 = vand.u32 2147483647, %v1239
        %vm1283 = vcmp.eq.f32.partialorder %v1282, 8.507059e+37
        %v1284 = vand.u32 %v1239, 2147483648
        %v1285 = vor.u32 1.1754944e-38, %v1284
        %v1286 = vsel %vm1283, %v1285, %v1281
        %v1287 = vmul.f32 1.0, %v1286
        %v1288 = vrcp.pop %v1242
        %v1289 = vmul.f32 %v1242, %v1288
        %v1290 = vsub.f32 1.0, %v1289
        %v1291 = vmul.f32 %v1288, %v1290
        %v1292 = vadd.f32 %v1288, %v1291
        %vm1293 = vweird.f32 %v1242
        %vm1294 = vweird.f32 %v1288
        %vm1295 = vmor %vm1293, %vm1294
        %v1296 = vsel %vm1295, %v1288, %v1292
        %v1297 = vand.u32 2147483647, %v1242
        %vm1298 = vcmp.eq.f32.partialorder %v1297, 8.507059e+37
        %v1299 = vand.u32 %v1242, 2147483648
        %v1300 = vor.u32 1.1754944e-38, %v1299
        %v1301 = vsel %vm1298, %v1300, %v1296
        %v1302 = vmul.f32 1.0, %v1301
        %v1303 = vmul.f32 %v1224, %v1257
        %v1304 = vmul.f32 %v1226, %v1272
        %v1305 = vmul.f32 %v1228, %v1287
        %v1306 = vmul.f32 %v1230, %v1302
        %v1307 = vpack.c.bf16 %v1303, %v1303
        %v1308 = vpack.c.bf16 %v1304, %v1304
        %v1309 = vpack.c.bf16 %v1305, %v1305
        %v1310 = vpack.c.bf16 %v1306, %v1306
        %v1312 = vsel %vm1130, %v1307, 0
        %vm1314 = vcmask 1043456
        %v1316 = vsel %vm1314, %v1120, 0
        %1318 = vmatpush.bf16.msra.mxu0 0
        %1319 = vmatpush.bf16.msra.mxu0 0
        %1320 = vmatpush.bf16.msra.mxu0 0
        %1321 = vmatpush.bf16.msra.mxu0 0
        %1322 = vmatpush.bf16.msra.mxu0 0
        %1323 = vmatpush.bf16.msra.mxu0 0
        %1324 = vmatpush.bf16.msra.mxu0 0
        %1325 = vmatpush.bf16.msra.mxu0 %v1316
        %1326 = vmatmul.bf16.gmra.mxu0 %v1312
        %v1327 = vpop.f32.mrf.mxu0
        %v1328 = vadd.f32 0.0, %v1327
        %v1329 = vpop.f32.mrf.mxu0
        %1330 = vdwg.mxu0
        %v1332 = vsel %vm1130, %v1308, 0
        %v1335 = vsel %vm1314, %v1123, 0
        %1337 = vmatpush.bf16.msra.mxu0 0
        %1338 = vmatpush.bf16.msra.mxu0 0
        %1339 = vmatpush.bf16.msra.mxu0 0
        %1340 = vmatpush.bf16.msra.mxu0 0
        %1341 = vmatpush.bf16.msra.mxu0 0
        %1342 = vmatpush.bf16.msra.mxu0 0
        %1343 = vmatpush.bf16.msra.mxu0 0
        %1344 = vmatpush.bf16.msra.mxu0 %v1335
        %1345 = vmatmul.bf16.gmra.mxu0 %v1332
        %v1346 = vpop.f32.mrf.mxu0
        %v1347 = vadd.f32 0.0, %v1346
        %v1348 = vpop.f32.mrf.mxu0
        %1349 = vdwg.mxu0
        %v1351 = vsel %vm1130, %v1309, 0
        %v1354 = vsel %vm1314, %v1126, 0
        %1356 = vmatpush.bf16.msra.mxu0 0
        %1357 = vmatpush.bf16.msra.mxu0 0
        %1358 = vmatpush.bf16.msra.mxu0 0
        %1359 = vmatpush.bf16.msra.mxu0 0
        %1360 = vmatpush.bf16.msra.mxu0 0
        %1361 = vmatpush.bf16.msra.mxu0 0
        %1362 = vmatpush.bf16.msra.mxu0 0
        %1363 = vmatpush.bf16.msra.mxu0 %v1354
        %1364 = vmatmul.bf16.gmra.mxu0 %v1351
        %v1365 = vpop.f32.mrf.mxu0
        %v1366 = vadd.f32 0.0, %v1365
        %v1367 = vpop.f32.mrf.mxu0
        %1368 = vdwg.mxu0
        %v1370 = vsel %vm1130, %v1310, 0
        %v1373 = vsel %vm1314, %v1129, 0
        %1375 = vmatpush.bf16.msra.mxu0 0
        %1376 = vmatpush.bf16.msra.mxu0 0
        %1377 = vmatpush.bf16.msra.mxu0 0
        %1378 = vmatpush.bf16.msra.mxu0 0
        %1379 = vmatpush.bf16.msra.mxu0 0
        %1380 = vmatpush.bf16.msra.mxu0 0
        %1381 = vmatpush.bf16.msra.mxu0 0
        %1382 = vmatpush.bf16.msra.mxu0 %v1373
        %1383 = vmatmul.bf16.gmra.mxu0 %v1370
        %v1384 = vpop.f32.mrf.mxu0
        %v1385 = vadd.f32 0.0, %v1384
        %v1386 = vpop.f32.mrf.mxu0
        %1387 = vdwg.mxu0
        %v1388 = vrot.slane %v1366, 4
        %vm1389 = vcmask 1047556
        %v1390 = vsel %vm1389, %v1388, %v1328
        %v1391 = vrot.slane %v1328, 4
        %v1392 = vsel %vm1389, %v1366, %v1391
        %v1394 = vunpack.c.l.s4 1983009808
        %v1395 = vunpack.c.0.s8 %v1394
        %v1396 = vperm.slane %v1390, %v1395
        %v1398 = vunpack.c.l.s4 1983009808
        %v1399 = vunpack.c.0.s8 %v1398
        %v1400 = vperm.slane %v1392, %v1399
        %v1401 = vrot.slane %v1385, 4
        %v1402 = vsel %vm1389, %v1401, %v1347
        %v1403 = vrot.slane %v1347, 4
        %v1404 = vsel %vm1389, %v1385, %v1403
        %v1406 = vunpack.c.l.s4 1983009808
        %v1407 = vunpack.c.0.s8 %v1406
        %v1408 = vperm.slane %v1402, %v1407
        %v1410 = vunpack.c.l.s4 1983009808
        %v1411 = vunpack.c.0.s8 %v1410
        %v1412 = vperm.slane %v1404, %v1411
        %v1413 = vrot.slane %v1408, 4
        %v1414 = vsel %vm1389, %v1413, %v1396
        %v1415 = vrot.slane %v1396, 4
        %v1416 = vsel %vm1389, %v1408, %v1415
        %v1418 = vunpack.c.l.s4 1934713408
        %v1419 = vunpack.c.0.s8 %v1418
        %v1420 = vperm.slane %v1414, %v1419
        %v1422 = vunpack.c.l.s4 1934713408
        %v1423 = vunpack.c.0.s8 %v1422
        %v1424 = vperm.slane %v1416, %v1423
        %v1425 = vrot.slane %v1412, 4
        %v1426 = vsel %vm1389, %v1425, %v1400
        %v1427 = vrot.slane %v1400, 4
        %v1428 = vsel %vm1389, %v1412, %v1427
        %v1430 = vunpack.c.l.s4 1934713408
        %v1431 = vunpack.c.0.s8 %v1430
        %v1432 = vperm.slane %v1426, %v1431
        %v1434 = vunpack.c.l.s4 1934713408
        %v1435 = vunpack.c.0.s8 %v1434
        %v1436 = vperm.slane %v1428, %v1435
        %v1437 = vrot.slane %v1420, 4
        %v1438 = vsel %vm1389, 0.0, %v1437
        %v1439 = vrot.slane %v1424, 4
        %v1440 = vsel %vm1389, 0.0, %v1439
        %v1441 = vrot.slane %v1432, 4
        %v1442 = vsel %vm1389, 0.0, %v1441
        %v1443 = vrot.slane %v1436, 4
        %v1444 = vsel %vm1389, 0.0, %v1443
        %v1445 = vsel %vm1389, %v1439, %v1420
        %v1447 = vunpack.c.l.s4 1983009808
        %v1448 = vunpack.c.0.s8 %v1447
        %v1449 = vperm.slane %v1445, %v1448
        %v1450 = vrot.slane %v1440, 4
        %v1451 = vsel %vm1389, %v1450, %v1438
        %v1453 = vunpack.c.l.s4 1983009808
        %v1454 = vunpack.c.0.s8 %v1453
        %v1455 = vperm.slane %v1451, %v1454
        %v1456 = vsel %vm1389, %v1443, %v1432
        %v1458 = vunpack.c.l.s4 1983009808
        %v1459 = vunpack.c.0.s8 %v1458
        %v1460 = vperm.slane %v1456, %v1459
        %v1461 = vrot.slane %v1444, 4
        %v1462 = vsel %vm1389, %v1461, %v1442
        %v1464 = vunpack.c.l.s4 1983009808
        %v1465 = vunpack.c.0.s8 %v1464
        %v1466 = vperm.slane %v1462, %v1465
        %v1467 = vrot.slane %v1455, 4
        %v1468 = vsel %vm1389, %v1467, %v1449
        %v1469 = vrot.slane %v1449, 4
        %v1470 = vsel %vm1389, %v1455, %v1469
        %v1472 = vunpack.c.l.s4 1934713408
        %v1473 = vunpack.c.0.s8 %v1472
        %v1474 = vperm.slane %v1468, %v1473
        %v1476 = vunpack.c.l.s4 1934713408
        %v1477 = vunpack.c.0.s8 %v1476
        %v1478 = vperm.slane %v1470, %v1477
        %v1479 = vrot.slane %v1466, 4
        %v1480 = vsel %vm1389, %v1479, %v1460
        %v1481 = vrot.slane %v1460, 4
        %v1482 = vsel %vm1389, %v1466, %v1481
        %v1484 = vunpack.c.l.s4 1934713408
        %v1485 = vunpack.c.0.s8 %v1484
        %v1486 = vperm.slane %v1480, %v1485
        %v1488 = vunpack.c.l.s4 1934713408
        %v1489 = vunpack.c.0.s8 %v1488
        %v1490 = vperm.slane %v1482, %v1489
        %v1491 = vrot.slane %v1486, 4
        %v1492 = vsel %vm1389, %v1491, %v1474
        %v1493 = vrot.slane %v1474, 4
        %v1494 = vsel %vm1389, %v1486, %v1493
        %v1495 = vrot.slane %v1490, 4
        %v1496 = vsel %vm1389, %v1495, %v1478
        %v1497 = vrot.slane %v1478, 4
        %v1498 = vsel %vm1389, %v1490, %v1497
        %1500 = vrot.lane.b32.xlu0 %v1494, 8
        %v1501 = vpop.permute.xlu0 %1500
        %1504 = vrot.lane.b32.xlu0 %v1496, 16
        %v1505 = vpop.permute.xlu0 %1504
        %1508 = vrot.lane.b32.xlu0 %v1498, 24
        %v1509 = vpop.permute.xlu0 %1508
        %v1511 = vsel %vm1130, %v1492, %v1501
        %vm1512 = vcmask 130048
        %v1513 = vsel %vm1512, %v1511, %v1505
        %vm1514 = vcmask 195584
        %v1515 = vsel %vm1514, %v1513, %v1509
        %1517 = vrot.lane.b32.xlu0 %v763, 120
        %v1518 = vpop.permute.xlu0 %1517
        %1519 = vrot.lane.b32.xlu0 %v763, 112
        %v1520 = vpop.permute.xlu0 %1519
        %1521 = vrot.lane.b32.xlu0 %v763, 104
        %v1522 = vpop.permute.xlu0 %1521
        %v1525 = vpack.i.b16 %v1518, %v763
        %v1526 = vshrl.u32 %v763, 16
        %v1527 = vshrl.u32 %v1518, 16
        %v1528 = vpack.i.b16 %v1527, %v1526
        %v1531 = vpack.i.b16 %v1522, %v1520
        %v1532 = vshrl.u32 %v1520, 16
        %v1533 = vshrl.u32 %v1522, 16
        %v1534 = vpack.i.b16 %v1533, %v1532
        %v1537 = vunpack.c.l.s4 1983009808
        %v1538 = vunpack.c.0.s8 %v1537
        %v1539 = vperm.slane %v1525, %v1538
        %v1542 = vunpack.c.l.s4 1983009808
        %v1543 = vunpack.c.0.s8 %v1542
        %v1544 = vperm.slane %v1531, %v1543
        %v1545 = vrot.slane %v1544, 4
        %v1546 = vsel %vm794, %v1545, %v1539
        %v1547 = vrot.slane %v1539, 4
        %v1548 = vsel %vm794, %v1544, %v1547
        %v1550 = vunpack.c.l.s4 1934713408
        %v1551 = vunpack.c.0.s8 %v1550
        %v1552 = vperm.slane %v1546, %v1551
        %v1554 = vunpack.c.l.s4 1934713408
        %v1555 = vunpack.c.0.s8 %v1554
        %v1556 = vperm.slane %v1548, %v1555
        %v1557 = vrot.slane %v1552, 4
        %v1558 = vsel %vm794, 0, %v1557
        %v1559 = vrot.slane %v1556, 4
        %v1560 = vsel %vm794, 0, %v1559
        %v1563 = vunpack.c.l.s4 1983009808
        %v1564 = vunpack.c.0.s8 %v1563
        %v1565 = vperm.slane %v1528, %v1564
        %v1568 = vunpack.c.l.s4 1983009808
        %v1569 = vunpack.c.0.s8 %v1568
        %v1570 = vperm.slane %v1534, %v1569
        %v1571 = vrot.slane %v1570, 4
        %v1572 = vsel %vm794, %v1571, %v1565
        %v1573 = vrot.slane %v1565, 4
        %v1574 = vsel %vm794, %v1570, %v1573
        %v1576 = vunpack.c.l.s4 1934713408
        %v1577 = vunpack.c.0.s8 %v1576
        %v1578 = vperm.slane %v1572, %v1577
        %v1580 = vunpack.c.l.s4 1934713408
        %v1581 = vunpack.c.0.s8 %v1580
        %v1582 = vperm.slane %v1574, %v1581
        %v1583 = vrot.slane %v1578, 4
        %v1584 = vsel %vm794, 0, %v1583
        %v1585 = vrot.slane %v1582, 4
        %v1586 = vsel %vm794, 0, %v1585
        %v1587 = vsel %vm794, %v1559, %v1552
        %v1589 = vunpack.c.l.s4 1983009808
        %v1590 = vunpack.c.0.s8 %v1589
        %v1591 = vperm.slane %v1587, %v1590
        %v1592 = vrot.slane %v1560, 4
        %v1593 = vsel %vm794, %v1592, %v1558
        %v1595 = vunpack.c.l.s4 1983009808
        %v1596 = vunpack.c.0.s8 %v1595
        %v1597 = vperm.slane %v1593, %v1596
        %v1598 = vrot.slane %v1597, 4
        %v1599 = vsel %vm794, %v1598, %v1591
        %v1601 = vunpack.c.l.s4 1934713408
        %v1602 = vunpack.c.0.s8 %v1601
        %v1603 = vperm.slane %v1599, %v1602
        %v1604 = vrot.slane %v1603, 4
        %v1605 = vsel %vm794, 0, %v1604
        %v1606 = vsel %vm794, %v1585, %v1578
        %v1608 = vunpack.c.l.s4 1983009808
        %v1609 = vunpack.c.0.s8 %v1608
        %v1610 = vperm.slane %v1606, %v1609
        %v1611 = vrot.slane %v1586, 4
        %v1612 = vsel %vm794, %v1611, %v1584
        %v1614 = vunpack.c.l.s4 1983009808
        %v1615 = vunpack.c.0.s8 %v1614
        %v1616 = vperm.slane %v1612, %v1615
        %v1617 = vrot.slane %v1616, 4
        %v1618 = vsel %vm794, %v1617, %v1610
        %v1620 = vunpack.c.l.s4 1934713408
        %v1621 = vunpack.c.0.s8 %v1620
        %v1622 = vperm.slane %v1618, %v1621
        %v1623 = vrot.slane %v1622, 4
        %v1624 = vsel %vm794, 0, %v1623
        %v1627 = vpack.i.b16 %v1622, %v1603
        %v1628 = vshrl.u32 %v1603, 16
        %v1629 = vshrl.u32 %v1622, 16
        %v1630 = vpack.i.b16 %v1629, %v1628
        %v1633 = vpack.i.b16 %v1624, %v1605
        %v1634 = vshrl.u32 %v1605, 16
        %v1635 = vshrl.u32 %v1624, 16
        %v1636 = vpack.i.b16 %v1635, %v1634
        %1637 = vrot.lane.b32.xlu0 %v763, 96
        %v1638 = vpop.permute.xlu0 %1637
        %1639 = vrot.lane.b32.xlu0 %v1518, 96
        %v1640 = vpop.permute.xlu0 %1639
        %1641 = vrot.lane.b32.xlu0 %v1520, 96
        %v1642 = vpop.permute.xlu0 %1641
        %1643 = vrot.lane.b32.xlu0 %v1522, 96
        %v1644 = vpop.permute.xlu0 %1643
        %v1647 = vpack.i.b16 %v1640, %v1638
        %v1648 = vshrl.u32 %v1638, 16
        %v1649 = vshrl.u32 %v1640, 16
        %v1650 = vpack.i.b16 %v1649, %v1648
        %v1653 = vpack.i.b16 %v1644, %v1642
        %v1654 = vshrl.u32 %v1642, 16
        %v1655 = vshrl.u32 %v1644, 16
        %v1656 = vpack.i.b16 %v1655, %v1654
        %v1659 = vunpack.c.l.s4 1983009808
        %v1660 = vunpack.c.0.s8 %v1659
        %v1661 = vperm.slane %v1647, %v1660
        %v1664 = vunpack.c.l.s4 1983009808
        %v1665 = vunpack.c.0.s8 %v1664
        %v1666 = vperm.slane %v1653, %v1665
        %v1667 = vrot.slane %v1666, 4
        %v1668 = vsel %vm794, %v1667, %v1661
        %v1669 = vrot.slane %v1661, 4
        %v1670 = vsel %vm794, %v1666, %v1669
        %v1672 = vunpack.c.l.s4 1934713408
        %v1673 = vunpack.c.0.s8 %v1672
        %v1674 = vperm.slane %v1668, %v1673
        %v1676 = vunpack.c.l.s4 1934713408
        %v1677 = vunpack.c.0.s8 %v1676
        %v1678 = vperm.slane %v1670, %v1677
        %v1679 = vrot.slane %v1674, 4
        %v1680 = vsel %vm794, 0, %v1679
        %v1681 = vrot.slane %v1678, 4
        %v1682 = vsel %vm794, 0, %v1681
        %v1685 = vunpack.c.l.s4 1983009808
        %v1686 = vunpack.c.0.s8 %v1685
        %v1687 = vperm.slane %v1650, %v1686
        %v1690 = vunpack.c.l.s4 1983009808
        %v1691 = vunpack.c.0.s8 %v1690
        %v1692 = vperm.slane %v1656, %v1691
        %v1693 = vrot.slane %v1692, 4
        %v1694 = vsel %vm794, %v1693, %v1687
        %v1695 = vrot.slane %v1687, 4
        %v1696 = vsel %vm794, %v1692, %v1695
        %v1698 = vunpack.c.l.s4 1934713408
        %v1699 = vunpack.c.0.s8 %v1698
        %v1700 = vperm.slane %v1694, %v1699
        %v1702 = vunpack.c.l.s4 1934713408
        %v1703 = vunpack.c.0.s8 %v1702
        %v1704 = vperm.slane %v1696, %v1703
        %v1705 = vrot.slane %v1700, 4
        %v1706 = vsel %vm794, 0, %v1705
        %v1707 = vrot.slane %v1704, 4
        %v1708 = vsel %vm794, 0, %v1707
        %v1709 = vsel %vm794, %v1681, %v1674
        %v1711 = vunpack.c.l.s4 1983009808
        %v1712 = vunpack.c.0.s8 %v1711
        %v1713 = vperm.slane %v1709, %v1712
        %v1714 = vrot.slane %v1682, 4
        %v1715 = vsel %vm794, %v1714, %v1680
        %v1717 = vunpack.c.l.s4 1983009808
        %v1718 = vunpack.c.0.s8 %v1717
        %v1719 = vperm.slane %v1715, %v1718
        %v1720 = vrot.slane %v1719, 4
        %v1721 = vsel %vm794, %v1720, %v1713
        %v1723 = vunpack.c.l.s4 1934713408
        %v1724 = vunpack.c.0.s8 %v1723
        %v1725 = vperm.slane %v1721, %v1724
        %v1726 = vrot.slane %v1725, 4
        %v1727 = vsel %vm794, 0, %v1726
        %v1728 = vsel %vm794, %v1707, %v1700
        %v1730 = vunpack.c.l.s4 1983009808
        %v1731 = vunpack.c.0.s8 %v1730
        %v1732 = vperm.slane %v1728, %v1731
        %v1733 = vrot.slane %v1708, 4
        %v1734 = vsel %vm794, %v1733, %v1706
        %v1736 = vunpack.c.l.s4 1983009808
        %v1737 = vunpack.c.0.s8 %v1736
        %v1738 = vperm.slane %v1734, %v1737
        %v1739 = vrot.slane %v1738, 4
        %v1740 = vsel %vm794, %v1739, %v1732
        %v1742 = vunpack.c.l.s4 1934713408
        %v1743 = vunpack.c.0.s8 %v1742
        %v1744 = vperm.slane %v1740, %v1743
        %v1745 = vrot.slane %v1744, 4
        %v1746 = vsel %vm794, 0, %v1745
        %v1749 = vpack.i.b16 %v1744, %v1725
        %v1750 = vshrl.u32 %v1725, 16
        %v1751 = vshrl.u32 %v1744, 16
        %v1752 = vpack.i.b16 %v1751, %v1750
        %v1755 = vpack.i.b16 %v1746, %v1727
        %v1756 = vshrl.u32 %v1727, 16
        %v1757 = vshrl.u32 %v1746, 16
        %v1758 = vpack.i.b16 %v1757, %v1756
        %1759 = vrot.lane.b32.xlu0 %v763, 64
        %v1760 = vpop.permute.xlu0 %1759
        %1761 = vrot.lane.b32.xlu0 %v1518, 64
        %v1762 = vpop.permute.xlu0 %1761
        %1763 = vrot.lane.b32.xlu0 %v1520, 64
        %v1764 = vpop.permute.xlu0 %1763
        %1765 = vrot.lane.b32.xlu0 %v1522, 64
        %v1766 = vpop.permute.xlu0 %1765
        %v1769 = vpack.i.b16 %v1762, %v1760
        %v1770 = vshrl.u32 %v1760, 16
        %v1771 = vshrl.u32 %v1762, 16
        %v1772 = vpack.i.b16 %v1771, %v1770
        %v1775 = vpack.i.b16 %v1766, %v1764
        %v1776 = vshrl.u32 %v1764, 16
        %v1777 = vshrl.u32 %v1766, 16
        %v1778 = vpack.i.b16 %v1777, %v1776
        %v1781 = vunpack.c.l.s4 1983009808
        %v1782 = vunpack.c.0.s8 %v1781
        %v1783 = vperm.slane %v1769, %v1782
        %v1786 = vunpack.c.l.s4 1983009808
        %v1787 = vunpack.c.0.s8 %v1786
        %v1788 = vperm.slane %v1775, %v1787
        %v1789 = vrot.slane %v1788, 4
        %v1790 = vsel %vm794, %v1789, %v1783
        %v1791 = vrot.slane %v1783, 4
        %v1792 = vsel %vm794, %v1788, %v1791
        %v1794 = vunpack.c.l.s4 1934713408
        %v1795 = vunpack.c.0.s8 %v1794
        %v1796 = vperm.slane %v1790, %v1795
        %v1798 = vunpack.c.l.s4 1934713408
        %v1799 = vunpack.c.0.s8 %v1798
        %v1800 = vperm.slane %v1792, %v1799
        %v1801 = vrot.slane %v1796, 4
        %v1802 = vsel %vm794, 0, %v1801
        %v1803 = vrot.slane %v1800, 4
        %v1804 = vsel %vm794, 0, %v1803
        %v1807 = vunpack.c.l.s4 1983009808
        %v1808 = vunpack.c.0.s8 %v1807
        %v1809 = vperm.slane %v1772, %v1808
        %v1812 = vunpack.c.l.s4 1983009808
        %v1813 = vunpack.c.0.s8 %v1812
        %v1814 = vperm.slane %v1778, %v1813
        %v1815 = vrot.slane %v1814, 4
        %v1816 = vsel %vm794, %v1815, %v1809
        %v1817 = vrot.slane %v1809, 4
        %v1818 = vsel %vm794, %v1814, %v1817
        %v1820 = vunpack.c.l.s4 1934713408
        %v1821 = vunpack.c.0.s8 %v1820
        %v1822 = vperm.slane %v1816, %v1821
        %v1824 = vunpack.c.l.s4 1934713408
        %v1825 = vunpack.c.0.s8 %v1824
        %v1826 = vperm.slane %v1818, %v1825
        %v1827 = vrot.slane %v1822, 4
        %v1828 = vsel %vm794, 0, %v1827
        %v1829 = vrot.slane %v1826, 4
        %v1830 = vsel %vm794, 0, %v1829
        %v1831 = vsel %vm794, %v1803, %v1796
        %v1833 = vunpack.c.l.s4 1983009808
        %v1834 = vunpack.c.0.s8 %v1833
        %v1835 = vperm.slane %v1831, %v1834
        %v1836 = vrot.slane %v1804, 4
        %v1837 = vsel %vm794, %v1836, %v1802
        %v1839 = vunpack.c.l.s4 1983009808
        %v1840 = vunpack.c.0.s8 %v1839
        %v1841 = vperm.slane %v1837, %v1840
        %v1842 = vrot.slane %v1841, 4
        %v1843 = vsel %vm794, %v1842, %v1835
        %v1845 = vunpack.c.l.s4 1934713408
        %v1846 = vunpack.c.0.s8 %v1845
        %v1847 = vperm.slane %v1843, %v1846
        %v1848 = vrot.slane %v1847, 4
        %v1849 = vsel %vm794, 0, %v1848
        %v1850 = vsel %vm794, %v1829, %v1822
        %v1852 = vunpack.c.l.s4 1983009808
        %v1853 = vunpack.c.0.s8 %v1852
        %v1854 = vperm.slane %v1850, %v1853
        %v1855 = vrot.slane %v1830, 4
        %v1856 = vsel %vm794, %v1855, %v1828
        %v1858 = vunpack.c.l.s4 1983009808
        %v1859 = vunpack.c.0.s8 %v1858
        %v1860 = vperm.slane %v1856, %v1859
        %v1861 = vrot.slane %v1860, 4
        %v1862 = vsel %vm794, %v1861, %v1854
        %v1864 = vunpack.c.l.s4 1934713408
        %v1865 = vunpack.c.0.s8 %v1864
        %v1866 = vperm.slane %v1862, %v1865
        %v1867 = vrot.slane %v1866, 4
        %v1868 = vsel %vm794, 0, %v1867
        %v1871 = vpack.i.b16 %v1866, %v1847
        %v1872 = vshrl.u32 %v1847, 16
        %v1873 = vshrl.u32 %v1866, 16
        %v1874 = vpack.i.b16 %v1873, %v1872
        %v1877 = vpack.i.b16 %v1868, %v1849
        %v1878 = vshrl.u32 %v1849, 16
        %v1879 = vshrl.u32 %v1868, 16
        %v1880 = vpack.i.b16 %v1879, %v1878
        %v1882 = vsel %vm1130, %v1627, 0
        %v1885 = vsel %vm1130, %v1749, 0
        %1887 = vmatpush.bf16.xpose.msra.mxu0 0
        %1888 = vmatpush.bf16.xpose.msra.mxu0 0
        %1889 = vmatpush.bf16.xpose.msra.mxu0 0
        %1890 = vmatpush.bf16.xpose.msra.mxu0 0
        %1891 = vmatpush.bf16.xpose.msra.mxu0 0
        %1892 = vmatpush.bf16.xpose.msra.mxu0 0
        %1893 = vmatpush.bf16.xpose.msra.mxu0 0
        %1894 = vmatpush.bf16.xpose.msra.mxu0 %v1885
        %1895 = vmatmul.bf16.gmra.mxu0 %v1882
        %v1896 = vpop.f32.mrf.mxu0
        %v1897 = vadd.f32 0.0, %v1896
        %v1898 = vpop.f32.mrf.mxu0
        %1899 = vdwg.mxu0
        %v1901 = vsel %vm1130, %v1630, 0
        %v1904 = vsel %vm1130, %v1752, 0
        %1906 = vmatpush.bf16.xpose.msra.mxu0 0
        %1907 = vmatpush.bf16.xpose.msra.mxu0 0
        %1908 = vmatpush.bf16.xpose.msra.mxu0 0
        %1909 = vmatpush.bf16.xpose.msra.mxu0 0
        %1910 = vmatpush.bf16.xpose.msra.mxu0 0
        %1911 = vmatpush.bf16.xpose.msra.mxu0 0
        %1912 = vmatpush.bf16.xpose.msra.mxu0 0
        %1913 = vmatpush.bf16.xpose.msra.mxu0 %v1904
        %1914 = vmatmul.bf16.gmra.mxu0 %v1901
        %v1915 = vpop.f32.mrf.mxu0
        %v1916 = vadd.f32 0.0, %v1915
        %v1917 = vpop.f32.mrf.mxu0
        %1918 = vdwg.mxu0
        %v1920 = vsel %vm1130, %v1633, 0
        %v1923 = vsel %vm1130, %v1755, 0
        %1925 = vmatpush.bf16.xpose.msra.mxu0 0
        %1926 = vmatpush.bf16.xpose.msra.mxu0 0
        %1927 = vmatpush.bf16.xpose.msra.mxu0 0
        %1928 = vmatpush.bf16.xpose.msra.mxu0 0
        %1929 = vmatpush.bf16.xpose.msra.mxu0 0
        %1930 = vmatpush.bf16.xpose.msra.mxu0 0
        %1931 = vmatpush.bf16.xpose.msra.mxu0 0
        %1932 = vmatpush.bf16.xpose.msra.mxu0 %v1923
        %1933 = vmatmul.bf16.gmra.mxu0 %v1920
        %v1934 = vpop.f32.mrf.mxu0
        %v1935 = vadd.f32 0.0, %v1934
        %v1936 = vpop.f32.mrf.mxu0
        %1937 = vdwg.mxu0
        %v1939 = vsel %vm1130, %v1636, 0
        %v1942 = vsel %vm1130, %v1758, 0
        %1944 = vmatpush.bf16.xpose.msra.mxu0 0
        %1945 = vmatpush.bf16.xpose.msra.mxu0 0
        %1946 = vmatpush.bf16.xpose.msra.mxu0 0
        %1947 = vmatpush.bf16.xpose.msra.mxu0 0
        %1948 = vmatpush.bf16.xpose.msra.mxu0 0
        %1949 = vmatpush.bf16.xpose.msra.mxu0 0
        %1950 = vmatpush.bf16.xpose.msra.mxu0 0
        %1951 = vmatpush.bf16.xpose.msra.mxu0 %v1942
        %1952 = vmatmul.bf16.gmra.mxu0 %v1939
        %v1953 = vpop.f32.mrf.mxu0
        %v1954 = vadd.f32 0.0, %v1953
        %v1955 = vpop.f32.mrf.mxu0
        %1956 = vdwg.mxu0
        %v1957 = vsel %vm1130, %v1897, -inf
        %1958 = vmax.xlane.f32.xlu0 %v1957
        %v1959 = vpop.xlane.xlu0 %1958
        %v1960 = vsel %vm1130, %v1916, -inf
        %1961 = vmax.xlane.f32.xlu0 %v1960
        %v1962 = vpop.xlane.xlu0 %1961
        %v1963 = vsel %vm1130, %v1935, -inf
        %1964 = vmax.xlane.f32.xlu0 %v1963
        %v1965 = vpop.xlane.xlu0 %1964
        %v1966 = vsel %vm1130, %v1954, -inf
        %1967 = vmax.xlane.f32.xlu0 %v1966
        %v1968 = vpop.xlane.xlu0 %1967
        %v1969 = vsub.f32 %v1897, %v1959
        %v1970 = vsub.f32 %v1916, %v1962
        %v1971 = vsub.f32 %v1935, %v1965
        %v1972 = vsub.f32 %v1954, %v1968
        %v1973 = vmul.f32 %v1969, 1.442695
        %v1974 = vpow.pop %v1973
        %v1975 = vmul.f32 %v1970, 1.442695
        %v1976 = vpow.pop %v1975
        %v1977 = vmul.f32 %v1971, 1.442695
        %v1978 = vpow.pop %v1977
        %v1979 = vmul.f32 %v1972, 1.442695
        %v1980 = vpow.pop %v1979
        %v1981 = vsel %vm1130, %v1974, 0.0
        %1982 = vadd.xlane.f32.xlu0 %v1981
        %v1983 = vpop.xlane.xlu0 %1982
        %v1984 = vsel %vm1130, %v1976, 0.0
        %1985 = vadd.xlane.f32.xlu0 %v1984
        %v1986 = vpop.xlane.xlu0 %1985
        %v1987 = vsel %vm1130, %v1978, 0.0
        %1988 = vadd.xlane.f32.xlu0 %v1987
        %v1989 = vpop.xlane.xlu0 %1988
        %v1990 = vsel %vm1130, %v1980, 0.0
        %1991 = vadd.xlane.f32.xlu0 %v1990
        %v1992 = vpop.xlane.xlu0 %1991
        %v1993 = vrcp.pop %v1983
        %v1994 = vmul.f32 %v1983, %v1993
        %v1995 = vsub.f32 1.0, %v1994
        %v1996 = vmul.f32 %v1993, %v1995
        %v1997 = vadd.f32 %v1993, %v1996
        %vm1998 = vweird.f32 %v1983
        %vm1999 = vweird.f32 %v1993
        %vm2000 = vmor %vm1998, %vm1999
        %v2001 = vsel %vm2000, %v1993, %v1997
        %v2002 = vand.u32 2147483647, %v1983
        %vm2003 = vcmp.eq.f32.partialorder %v2002, 8.507059e+37
        %v2004 = vand.u32 %v1983, 2147483648
        %v2005 = vor.u32 1.1754944e-38, %v2004
        %v2006 = vsel %vm2003, %v2005, %v2001
        %v2007 = vmul.f32 1.0, %v2006
        %v2008 = vrcp.pop %v1986
        %v2009 = vmul.f32 %v1986, %v2008
        %v2010 = vsub.f32 1.0, %v2009
        %v2011 = vmul.f32 %v2008, %v2010
        %v2012 = vadd.f32 %v2008, %v2011
        %vm2013 = vweird.f32 %v1986
        %vm2014 = vweird.f32 %v2008
        %vm2015 = vmor %vm2013, %vm2014
        %v2016 = vsel %vm2015, %v2008, %v2012
        %v2017 = vand.u32 2147483647, %v1986
        %vm2018 = vcmp.eq.f32.partialorder %v2017, 8.507059e+37
        %v2019 = vand.u32 %v1986, 2147483648
        %v2020 = vor.u32 1.1754944e-38, %v2019
        %v2021 = vsel %vm2018, %v2020, %v2016
        %v2022 = vmul.f32 1.0, %v2021
        %v2023 = vrcp.pop %v1989
        %v2024 = vmul.f32 %v1989, %v2023
        %v2025 = vsub.f32 1.0, %v2024
        %v2026 = vmul.f32 %v2023, %v2025
        %v2027 = vadd.f32 %v2023, %v2026
        %vm2028 = vweird.f32 %v1989
        %vm2029 = vweird.f32 %v2023
        %vm2030 = vmor %vm2028, %vm2029
        %v2031 = vsel %vm2030, %v2023, %v2027
        %v2032 = vand.u32 2147483647, %v1989
        %vm2033 = vcmp.eq.f32.partialorder %v2032, 8.507059e+37
        %v2034 = vand.u32 %v1989, 2147483648
        %v2035 = vor.u32 1.1754944e-38, %v2034
        %v2036 = vsel %vm2033, %v2035, %v2031
        %v2037 = vmul.f32 1.0, %v2036
        %v2038 = vrcp.pop %v1992
        %v2039 = vmul.f32 %v1992, %v2038
        %v2040 = vsub.f32 1.0, %v2039
        %v2041 = vmul.f32 %v2038, %v2040
        %v2042 = vadd.f32 %v2038, %v2041
        %vm2043 = vweird.f32 %v1992
        %vm2044 = vweird.f32 %v2038
        %vm2045 = vmor %vm2043, %vm2044
        %v2046 = vsel %vm2045, %v2038, %v2042
        %v2047 = vand.u32 2147483647, %v1992
        %vm2048 = vcmp.eq.f32.partialorder %v2047, 8.507059e+37
        %v2049 = vand.u32 %v1992, 2147483648
        %v2050 = vor.u32 1.1754944e-38, %v2049
        %v2051 = vsel %vm2048, %v2050, %v2046
        %v2052 = vmul.f32 1.0, %v2051
        %v2053 = vmul.f32 %v1974, %v2007
        %v2054 = vmul.f32 %v1976, %v2022
        %v2055 = vmul.f32 %v1978, %v2037
        %v2056 = vmul.f32 %v1980, %v2052
        %v2057 = vpack.c.bf16 %v2053, %v2053
        %v2058 = vpack.c.bf16 %v2054, %v2054
        %v2059 = vpack.c.bf16 %v2055, %v2055
        %v2060 = vpack.c.bf16 %v2056, %v2056
        %v2062 = vsel %vm1130, %v2057, 0
        %v2065 = vsel %vm1314, %v1871, 0
        %2067 = vmatpush.bf16.msra.mxu0 0
        %2068 = vmatpush.bf16.msra.mxu0 0
        %2069 = vmatpush.bf16.msra.mxu0 0
        %2070 = vmatpush.bf16.msra.mxu0 0
        %2071 = vmatpush.bf16.msra.mxu0 0
        %2072 = vmatpush.bf16.msra.mxu0 0
        %2073 = vmatpush.bf16.msra.mxu0 0
        %2074 = vmatpush.bf16.msra.mxu0 %v2065
        %2075 = vmatmul.bf16.gmra.mxu0 %v2062
        %v2076 = vpop.f32.mrf.mxu0
        %v2077 = vadd.f32 0.0, %v2076
        %v2078 = vpop.f32.mrf.mxu0
        %2079 = vdwg.mxu0
        %v2081 = vsel %vm1130, %v2058, 0
        %v2084 = vsel %vm1314, %v1874, 0
        %2086 = vmatpush.bf16.msra.mxu0 0
        %2087 = vmatpush.bf16.msra.mxu0 0
        %2088 = vmatpush.bf16.msra.mxu0 0
        %2089 = vmatpush.bf16.msra.mxu0 0
        %2090 = vmatpush.bf16.msra.mxu0 0
        %2091 = vmatpush.bf16.msra.mxu0 0
        %2092 = vmatpush.bf16.msra.mxu0 0
        %2093 = vmatpush.bf16.msra.mxu0 %v2084
        %2094 = vmatmul.bf16.gmra.mxu0 %v2081
        %v2095 = vpop.f32.mrf.mxu0
        %v2096 = vadd.f32 0.0, %v2095
        %v2097 = vpop.f32.mrf.mxu0
        %2098 = vdwg.mxu0
        %v2100 = vsel %vm1130, %v2059, 0
        %v2103 = vsel %vm1314, %v1877, 0
        %2105 = vmatpush.bf16.msra.mxu0 0
        %2106 = vmatpush.bf16.msra.mxu0 0
        %2107 = vmatpush.bf16.msra.mxu0 0
        %2108 = vmatpush.bf16.msra.mxu0 0
        %2109 = vmatpush.bf16.msra.mxu0 0
        %2110 = vmatpush.bf16.msra.mxu0 0
        %2111 = vmatpush.bf16.msra.mxu0 0
        %2112 = vmatpush.bf16.msra.mxu0 %v2103
        %2113 = vmatmul.bf16.gmra.mxu0 %v2100
        %v2114 = vpop.f32.mrf.mxu0
        %v2115 = vadd.f32 0.0, %v2114
        %v2116 = vpop.f32.mrf.mxu0
        %2117 = vdwg.mxu0
        %v2119 = vsel %vm1130, %v2060, 0
        %v2122 = vsel %vm1314, %v1880, 0
        %2124 = vmatpush.bf16.msra.mxu0 0
        %2125 = vmatpush.bf16.msra.mxu0 0
        %2126 = vmatpush.bf16.msra.mxu0 0
        %2127 = vmatpush.bf16.msra.mxu0 0
        %2128 = vmatpush.bf16.msra.mxu0 0
        %2129 = vmatpush.bf16.msra.mxu0 0
        %2130 = vmatpush.bf16.msra.mxu0 0
        %2131 = vmatpush.bf16.msra.mxu0 %v2122
        %2132 = vmatmul.bf16.gmra.mxu0 %v2119
        %v2133 = vpop.f32.mrf.mxu0
        %v2134 = vadd.f32 0.0, %v2133
        %v2135 = vpop.f32.mrf.mxu0
        %2136 = vdwg.mxu0
        %v2137 = vrot.slane %v2115, 4
        %v2138 = vsel %vm1389, %v2137, %v2077
        %v2139 = vrot.slane %v2077, 4
        %v2140 = vsel %vm1389, %v2115, %v2139
        %v2142 = vunpack.c.l.s4 1983009808
        %v2143 = vunpack.c.0.s8 %v2142
        %v2144 = vperm.slane %v2138, %v2143
        %v2146 = vunpack.c.l.s4 1983009808
        %v2147 = vunpack.c.0.s8 %v2146
        %v2148 = vperm.slane %v2140, %v2147
        %v2149 = vrot.slane %v2134, 4
        %v2150 = vsel %vm1389, %v2149, %v2096
        %v2151 = vrot.slane %v2096, 4
        %v2152 = vsel %vm1389, %v2134, %v2151
        %v2154 = vunpack.c.l.s4 1983009808
        %v2155 = vunpack.c.0.s8 %v2154
        %v2156 = vperm.slane %v2150, %v2155
        %v2158 = vunpack.c.l.s4 1983009808
        %v2159 = vunpack.c.0.s8 %v2158
        %v2160 = vperm.slane %v2152, %v2159
        %v2161 = vrot.slane %v2156, 4
        %v2162 = vsel %vm1389, %v2161, %v2144
        %v2163 = vrot.slane %v2144, 4
        %v2164 = vsel %vm1389, %v2156, %v2163
        %v2166 = vunpack.c.l.s4 1934713408
        %v2167 = vunpack.c.0.s8 %v2166
        %v2168 = vperm.slane %v2162, %v2167
        %v2170 = vunpack.c.l.s4 1934713408
        %v2171 = vunpack.c.0.s8 %v2170
        %v2172 = vperm.slane %v2164, %v2171
        %v2173 = vrot.slane %v2160, 4
        %v2174 = vsel %vm1389, %v2173, %v2148
        %v2175 = vrot.slane %v2148, 4
        %v2176 = vsel %vm1389, %v2160, %v2175
        %v2178 = vunpack.c.l.s4 1934713408
        %v2179 = vunpack.c.0.s8 %v2178
        %v2180 = vperm.slane %v2174, %v2179
        %v2182 = vunpack.c.l.s4 1934713408
        %v2183 = vunpack.c.0.s8 %v2182
        %v2184 = vperm.slane %v2176, %v2183
        %v2185 = vrot.slane %v2168, 4
        %v2186 = vsel %vm1389, 0.0, %v2185
        %v2187 = vrot.slane %v2172, 4
        %v2188 = vsel %vm1389, 0.0, %v2187
        %v2189 = vrot.slane %v2180, 4
        %v2190 = vsel %vm1389, 0.0, %v2189
        %v2191 = vrot.slane %v2184, 4
        %v2192 = vsel %vm1389, 0.0, %v2191
        %v2193 = vsel %vm1389, %v2187, %v2168
        %v2195 = vunpack.c.l.s4 1983009808
        %v2196 = vunpack.c.0.s8 %v2195
        %v2197 = vperm.slane %v2193, %v2196
        %v2198 = vrot.slane %v2188, 4
        %v2199 = vsel %vm1389, %v2198, %v2186
        %v2201 = vunpack.c.l.s4 1983009808
        %v2202 = vunpack.c.0.s8 %v2201
        %v2203 = vperm.slane %v2199, %v2202
        %v2204 = vsel %vm1389, %v2191, %v2180
        %v2206 = vunpack.c.l.s4 1983009808
        %v2207 = vunpack.c.0.s8 %v2206
        %v2208 = vperm.slane %v2204, %v2207
        %v2209 = vrot.slane %v2192, 4
        %v2210 = vsel %vm1389, %v2209, %v2190
        %v2212 = vunpack.c.l.s4 1983009808
        %v2213 = vunpack.c.0.s8 %v2212
        %v2214 = vperm.slane %v2210, %v2213
        %v2215 = vrot.slane %v2203, 4
        %v2216 = vsel %vm1389, %v2215, %v2197
        %v2217 = vrot.slane %v2197, 4
        %v2218 = vsel %vm1389, %v2203, %v2217
        %v2220 = vunpack.c.l.s4 1934713408
        %v2221 = vunpack.c.0.s8 %v2220
        %v2222 = vperm.slane %v2216, %v2221
        %v2224 = vunpack.c.l.s4 1934713408
        %v2225 = vunpack.c.0.s8 %v2224
        %v2226 = vperm.slane %v2218, %v2225
        %v2227 = vrot.slane %v2214, 4
        %v2228 = vsel %vm1389, %v2227, %v2208
        %v2229 = vrot.slane %v2208, 4
        %v2230 = vsel %vm1389, %v2214, %v2229
        %v2232 = vunpack.c.l.s4 1934713408
        %v2233 = vunpack.c.0.s8 %v2232
        %v2234 = vperm.slane %v2228, %v2233
        %v2236 = vunpack.c.l.s4 1934713408
        %v2237 = vunpack.c.0.s8 %v2236
        %v2238 = vperm.slane %v2230, %v2237
        %v2239 = vrot.slane %v2234, 4
        %v2240 = vsel %vm1389, %v2239, %v2222
        %v2241 = vrot.slane %v2222, 4
        %v2242 = vsel %vm1389, %v2234, %v2241
        %v2243 = vrot.slane %v2238, 4
        %v2244 = vsel %vm1389, %v2243, %v2226
        %v2245 = vrot.slane %v2226, 4
        %v2246 = vsel %vm1389, %v2238, %v2245
        %2248 = vrot.lane.b32.xlu0 %v2242, 8
        %v2249 = vpop.permute.xlu0 %2248
        %2252 = vrot.lane.b32.xlu0 %v2244, 16
        %v2253 = vpop.permute.xlu0 %2252
        %2256 = vrot.lane.b32.xlu0 %v2246, 24
        %v2257 = vpop.permute.xlu0 %2256
        %v2259 = vsel %vm1130, %v2240, %v2249
        %v2260 = vsel %vm1512, %v2259, %v2253
        %v2261 = vsel %vm1514, %v2260, %v2257
        %v2262 = vpack.c.bf16 %v2261, %v1515
        %v2263 = vld [vmem:[%s625] sm:$0xf]
        %v2264 = vld [vmem:[%s625 + $0x4] sm:$0xf]
        %v2265 = vld [vmem:[%s625 + $0x8] sm:$0xf]
        %v2266 = vld [vmem:[%s625 + $0xc] sm:$0xf]
        %v2267 = vld [vmem:[%s628] sm:$0x1]
        %v2269 = vperm.slane %v2267, 0
        %v2275 = vunpack.c.l.b16 %v2263
        %v2276 = vunpack.c.l.b16 %v2264
        %v2277 = vunpack.c.l.b16 %v2265
        %v2278 = vunpack.c.l.b16 %v2266
        %v2279 = vpack.c.b16 %v2276, %v2275
        %v2280 = vpack.c.b16 %v2278, %v2277
        %v2284 = vsel %vm666, %v2262, 0
        %2286 = vmatpush.bf16.msra.mxu0 0
        %2287 = vmatpush.bf16.msra.mxu0 0
        %2288 = vmatpush.bf16.msra.mxu0 0
        %2289 = vmatpush.bf16.msra.mxu0 0
        %2290 = vmatpush.bf16.msra.mxu0 0
        %2291 = vmatpush.bf16.msra.mxu0 0
        %2292 = vmatpush.bf16.msra.mxu0 %v2280
        %2293 = vmatpush.bf16.msra.mxu0 %v2279
        %2294 = vmatmul.bf16.gmra.mxu0 %v2284
        %v2295 = vpop.f32.mrf.mxu0
        %v2296 = vadd.f32 %v2269, %v2295
        %v2297 = vpop.f32.mrf.mxu0
        %v2298 = vadd.f32 %v2269, %v2297
        %2299 = vdwg.mxu0
        %v2300 = vadd.f32 %v662, %v2296
        %v2301 = vadd.f32 %v663, %v2298
        %v2302 = vld [vmem:[%s631] sm:$0x1]
        %v2303 = vld [vmem:[%s634] sm:$0x1]
        %v2304 = vsel %vm666, %v2300, 0.0
        %2305 = vadd.xlane.f32.xlu0 %v2304
        %v2306 = vpop.xlane.xlu0 %2305
        %v2307 = vsel %vm666, %v2301, 0.0
        %2308 = vadd.xlane.f32.xlu0 %v2307
        %v2309 = vpop.xlane.xlu0 %2308
        %v2310 = vmul.f32 %v2306, %v679
        %v2311 = vmul.f32 %v2309, %v679
        %v2312 = vsub.f32 %v2300, %v2310
        %v2313 = vsub.f32 %v2301, %v2311
        %v2314 = vmul.f32 %v2312, %v2312
        %v2315 = vmul.f32 %v2313, %v2313
        %v2316 = vsel %vm666, %v2314, 0.0
        %2317 = vadd.xlane.f32.xlu0 %v2316
        %v2318 = vpop.xlane.xlu0 %2317
        %v2319 = vsel %vm666, %v2315, 0.0
        %2320 = vadd.xlane.f32.xlu0 %v2319
        %v2321 = vpop.xlane.xlu0 %2320
        %v2322 = vmul.f32 %v2318, %v679
        %v2323 = vmul.f32 %v2321, %v679
        %v2324 = vadd.f32 %v2322, 1e-05
        %v2325 = vadd.f32 %v2323, 1e-05
        %v2326 = vrsqrt.pop %v2324
        %v2327 = vmul.f32 %v2326, %v2324
        %v2328 = vmul.f32 %v2327, %v2326
        %v2329 = vmul.f32 0.5, %v2328
        %v2330 = vsub.f32 1.5, %v2329
        %v2331 = vmul.f32 %v2326, %v2330
        %vm2332 = vweird.f32 %v2324
        %vm2333 = vweird.f32 %v2326
        %vm2334 = vmor %vm2332, %vm2333
        %v2335 = vsel %vm2334, %v2326, %v2331
        %v2336 = vrsqrt.pop %v2325
        %v2337 = vmul.f32 %v2336, %v2325
        %v2338 = vmul.f32 %v2337, %v2336
        %v2339 = vmul.f32 0.5, %v2338
        %v2340 = vsub.f32 1.5, %v2339
        %v2341 = vmul.f32 %v2336, %v2340
        %vm2342 = vweird.f32 %v2325
        %vm2343 = vweird.f32 %v2336
        %vm2344 = vmor %vm2342, %vm2343
        %v2345 = vsel %vm2344, %v2336, %v2341
        %v2346 = vmul.f32 %v2312, %v2335
        %v2347 = vmul.f32 %v2313, %v2345
        %v2349 = vperm.slane %v2302, 0
        %v2351 = vmul.f32 %v2346, %v2349
        %v2352 = vmul.f32 %v2347, %v2349
        %v2354 = vperm.slane %v2303, 0
        %v2356 = vadd.f32 %v2351, %v2354
        %v2357 = vadd.f32 %v2352, %v2354
        %v2358 = vpack.c.bf16 %v2357, %v2356
        %v2359 = vld [vmem:[%s639] sm:$0xf]
        %v2360 = vld [vmem:[%s639 + $0x4] sm:$0xf]
        %v2361 = vld [vmem:[%s639 + $0x8] sm:$0xf]
        %v2362 = vld [vmem:[%s639 + $0xc] sm:$0xf]
        %v2363 = vld [vmem:[%s642] sm:$0x1]
        %v2365 = vperm.slane %v2363, 0
        %v2371 = vunpack.c.l.b16 %v2359
        %v2372 = vunpack.c.l.b16 %v2360
        %v2373 = vunpack.c.l.b16 %v2361
        %v2374 = vunpack.c.l.b16 %v2362
        %v2375 = vpack.c.b16 %v2372, %v2371
        %v2376 = vpack.c.b16 %v2374, %v2373
        %v2380 = vsel %vm666, %v2358, 0
        %2382 = vmatpush.bf16.msra.mxu0 0
        %2383 = vmatpush.bf16.msra.mxu0 0
        %2384 = vmatpush.bf16.msra.mxu0 0
        %2385 = vmatpush.bf16.msra.mxu0 0
        %2386 = vmatpush.bf16.msra.mxu0 0
        %2387 = vmatpush.bf16.msra.mxu0 0
        %2388 = vmatpush.bf16.msra.mxu0 %v2376
        %2389 = vmatpush.bf16.msra.mxu0 %v2375
        %2390 = vmatmul.bf16.gmra.mxu0 %v2380
        %v2391 = vpop.f32.mrf.mxu0
        %v2392 = vadd.f32 %v2365, %v2391
        %v2393 = vpop.f32.mrf.mxu0
        %v2394 = vadd.f32 %v2365, %v2393
        %2395 = vdwg.mxu0
        %v2396 = vmul.f32 %v2392, 0.5
        %v2397 = vmul.f32 %v2394, 0.5
        %v2398 = vmul.f32 %v2392, 0.70710677
        %v2399 = vmul.f32 %v2394, 0.70710677
        %vm2400 = vcmp.ge.f32.partialorder %v2398, 0.0
        %vm2401 = vcmp.ge.f32.partialorder %v2399, 0.0
        %v2402 = vsel %vm2400, 1.0, -1.0
        %v2403 = vsel %vm2401, 1.0, -1.0
        %v2404 = vand.u32 2147483647, %v2398
        %v2405 = vand.u32 2147483647, %v2399
        %v2406 = vmul.f32 %v2404, 0.3275911
        %v2407 = vmul.f32 %v2405, 0.3275911
        %v2408 = vadd.f32 %v2406, 1.0
        %v2409 = vadd.f32 %v2407, 1.0
        %v2410 = vrcp.pop %v2408
        %v2411 = vmul.f32 %v2408, %v2410
        %v2412 = vsub.f32 1.0, %v2411
        %v2413 = vmul.f32 %v2410, %v2412
        %v2414 = vadd.f32 %v2410, %v2413
        %vm2415 = vweird.f32 %v2408
        %vm2416 = vweird.f32 %v2410
        %vm2417 = vmor %vm2415, %vm2416
        %v2418 = vsel %vm2417, %v2410, %v2414
        %v2419 = vand.u32 2147483647, %v2408
        %vm2420 = vcmp.eq.f32.partialorder %v2419, 8.507059e+37
        %v2421 = vand.u32 %v2408, 2147483648
        %v2422 = vor.u32 1.1754944e-38, %v2421
        %v2423 = vsel %vm2420, %v2422, %v2418
        %v2424 = vmul.f32 1.0, %v2423
        %v2425 = vrcp.pop %v2409
        %v2426 = vmul.f32 %v2409, %v2425
        %v2427 = vsub.f32 1.0, %v2426
        %v2428 = vmul.f32 %v2425, %v2427
        %v2429 = vadd.f32 %v2425, %v2428
        %vm2430 = vweird.f32 %v2409
        %vm2431 = vweird.f32 %v2425
        %vm2432 = vmor %vm2430, %vm2431
        %v2433 = vsel %vm2432, %v2425, %v2429
        %v2434 = vand.u32 2147483647, %v2409
        %vm2435 = vcmp.eq.f32.partialorder %v2434, 8.507059e+37
        %v2436 = vand.u32 %v2409, 2147483648
        %v2437 = vor.u32 1.1754944e-38, %v2436
        %v2438 = vsel %vm2435, %v2437, %v2433
        %v2439 = vmul.f32 1.0, %v2438
        %v2440 = vmul.f32 %v2424, 1.0614054
        %v2441 = vmul.f32 %v2439, 1.0614054
        %v2442 = vadd.f32 %v2440, -1.4531521
        %v2443 = vadd.f32 %v2441, -1.4531521
        %v2444 = vmul.f32 %v2442, %v2424
        %v2445 = vmul.f32 %v2443, %v2439
        %v2446 = vadd.f32 %v2444, 1.4214138
        %v2447 = vadd.f32 %v2445, 1.4214138
        %v2448 = vmul.f32 %v2446, %v2424
        %v2449 = vmul.f32 %v2447, %v2439
        %v2450 = vadd.f32 %v2448, -0.28449672
        %v2451 = vadd.f32 %v2449, -0.28449672
        %v2452 = vmul.f32 %v2450, %v2424
        %v2453 = vmul.f32 %v2451, %v2439
        %v2454 = vadd.f32 %v2452, 0.2548296
        %v2455 = vadd.f32 %v2453, 0.2548296
        %v2456 = vmul.f32 %v2454, %v2424
        %v2457 = vmul.f32 %v2455, %v2439
        %v2458 = vsub.f32 0.0, %v2404
        %v2459 = vsub.f32 0.0, %v2405
        %v2460 = vmul.f32 %v2458, %v2404
        %v2461 = vmul.f32 %v2459, %v2405
        %v2462 = vmul.f32 %v2460, 1.442695
        %v2463 = vpow.pop %v2462
        %v2464 = vmul.f32 %v2461, 1.442695
        %v2465 = vpow.pop %v2464
        %v2466 = vmul.f32 %v2456, %v2463
        %v2467 = vmul.f32 %v2457, %v2465
        %v2468 = vsub.f32 1.0, %v2466
        %v2469 = vsub.f32 1.0, %v2467
        %v2470 = vmul.f32 %v2402, %v2468
        %v2471 = vmul.f32 %v2403, %v2469
        %v2472 = vadd.f32 %v2470, 1.0
        %v2473 = vadd.f32 %v2471, 1.0
        %v2474 = vmul.f32 %v2396, %v2472
        %v2475 = vmul.f32 %v2397, %v2473
        %v2476 = vpack.c.bf16 %v2475, %v2474
        %v2477 = vld [vmem:[%s647] sm:$0xf]
        %v2478 = vld [vmem:[%s647 + $0x4] sm:$0xf]
        %v2479 = vld [vmem:[%s647 + $0x8] sm:$0xf]
        %v2480 = vld [vmem:[%s647 + $0xc] sm:$0xf]
        %v2481 = vld [vmem:[%s647 + $0x10] sm:$0xf]
        %v2482 = vld [vmem:[%s647 + $0x14] sm:$0xf]
        %v2483 = vld [vmem:[%s647 + $0x18] sm:$0xf]
        %v2484 = vld [vmem:[%s647 + $0x1c] sm:$0xf]
        %v2485 = vld [vmem:[%s647 + $0x20] sm:$0xf]
        %v2486 = vld [vmem:[%s647 + $0x24] sm:$0xf]
        %v2487 = vld [vmem:[%s647 + $0x28] sm:$0xf]
        %v2488 = vld [vmem:[%s647 + $0x2c] sm:$0xf]
        %v2489 = vld [vmem:[%s647 + $0x30] sm:$0xf]
        %v2490 = vld [vmem:[%s647 + $0x34] sm:$0xf]
        %v2491 = vld [vmem:[%s647 + $0x38] sm:$0xf]
        %v2492 = vld [vmem:[%s647 + $0x3c] sm:$0xf]
        %v2493 = vld [vmem:[%s650] sm:$0x1]
        %v2495 = vperm.slane %v2493, 0
        %v2513 = vunpack.c.l.b16 %v2477
        %v2514 = vunpack.c.l.b16 %v2478
        %v2515 = vunpack.c.l.b16 %v2479
        %v2516 = vunpack.c.l.b16 %v2480
        %v2517 = vunpack.c.l.b16 %v2481
        %v2518 = vunpack.c.l.b16 %v2482
        %v2519 = vunpack.c.l.b16 %v2483
        %v2520 = vunpack.c.l.b16 %v2484
        %v2521 = vunpack.c.l.b16 %v2485
        %v2522 = vunpack.c.l.b16 %v2486
        %v2523 = vunpack.c.l.b16 %v2487
        %v2524 = vunpack.c.l.b16 %v2488
        %v2525 = vunpack.c.l.b16 %v2489
        %v2526 = vunpack.c.l.b16 %v2490
        %v2527 = vunpack.c.l.b16 %v2491
        %v2528 = vunpack.c.l.b16 %v2492
        %v2529 = vpack.c.b16 %v2514, %v2513
        %v2530 = vpack.c.b16 %v2516, %v2515
        %v2531 = vpack.c.b16 %v2518, %v2517
        %v2532 = vpack.c.b16 %v2520, %v2519
        %v2533 = vpack.c.b16 %v2522, %v2521
        %v2534 = vpack.c.b16 %v2524, %v2523
        %v2535 = vpack.c.b16 %v2526, %v2525
        %v2536 = vpack.c.b16 %v2528, %v2527
        %2545 = vmatpush.bf16.msra.mxu0 %v2536
        %2546 = vmatpush.bf16.msra.mxu0 %v2535
        %2547 = vmatpush.bf16.msra.mxu0 %v2534
        %2548 = vmatpush.bf16.msra.mxu0 %v2533
        %2549 = vmatpush.bf16.msra.mxu0 %v2532
        %2550 = vmatpush.bf16.msra.mxu0 %v2531
        %2551 = vmatpush.bf16.msra.mxu0 %v2530
        %2552 = vmatpush.bf16.msra.mxu0 %v2529
        %2553 = vmatmul.bf16.gmra.mxu0 %v2476
        %v2554 = vpop.f32.mrf.mxu0
        %v2555 = vadd.f32 %v2495, %v2554
        %v2556 = vpop.f32.mrf.mxu0
        %v2557 = vadd.f32 %v2495, %v2556
        %2558 = vdwg.mxu0
        %v2559 = vadd.f32 %v2300, %v2555
        %v2560 = vadd.f32 %v2301, %v2557
        %2561 = vst.msk [vmem:[#allocation2] sm:$0xff] %vm666, %v2559
        %2562 = vst.msk [vmem:[#allocation2 + $0x8] sm:$0xff] %vm666, %v2560
        %p2563 = scmp.eq.s32.totalorder %s31, 1
        // Predicated region
        $region81: #{tpu_custom_call.1} parent=75 // pred_check
          %p2564 = pneg %p2563
        $region82: #{tpu_custom_call.1} parent=75 // pred_check_branch
          %2566 = sbr.rel (%p2564) target = $region84
        $region83: #{tpu_custom_call.1} parent=75 // pred_region
          %v2567 = vld [vmem:[%s12] sm:$0x1]
          %v2568 = vld [vmem:[%s13] sm:$0x1]
          %v2569 = vsel %vm666, %v2559, 0.0
          %2570 = vadd.xlane.f32.xlu0 %v2569
          %v2571 = vpop.xlane.xlu0 %2570
          %v2572 = vsel %vm666, %v2560, 0.0
          %2573 = vadd.xlane.f32.xlu0 %v2572
          %v2574 = vpop.xlane.xlu0 %2573
          %v2575 = vmul.f32 %v2571, %v679
          %v2576 = vmul.f32 %v2574, %v679
          %v2577 = vsub.f32 %v2559, %v2575
          %v2578 = vsub.f32 %v2560, %v2576
          %v2579 = vmul.f32 %v2577, %v2577
          %v2580 = vmul.f32 %v2578, %v2578
          %v2581 = vsel %vm666, %v2579, 0.0
          %2582 = vadd.xlane.f32.xlu0 %v2581
          %v2583 = vpop.xlane.xlu0 %2582
          %v2584 = vsel %vm666, %v2580, 0.0
          %2585 = vadd.xlane.f32.xlu0 %v2584
          %v2586 = vpop.xlane.xlu0 %2585
          %v2587 = vmul.f32 %v2583, %v679
          %v2588 = vmul.f32 %v2586, %v679
          %v2589 = vadd.f32 %v2587, 1e-05
          %v2590 = vadd.f32 %v2588, 1e-05
          %v2591 = vrsqrt.pop %v2589
          %v2592 = vmul.f32 %v2591, %v2589
          %v2593 = vmul.f32 %v2592, %v2591
          %v2594 = vmul.f32 0.5, %v2593
          %v2595 = vsub.f32 1.5, %v2594
          %v2596 = vmul.f32 %v2591, %v2595
          %vm2597 = vweird.f32 %v2589
          %vm2598 = vweird.f32 %v2591
          %vm2599 = vmor %vm2597, %vm2598
          %v2600 = vsel %vm2599, %v2591, %v2596
          %v2601 = vrsqrt.pop %v2590
          %v2602 = vmul.f32 %v2601, %v2590
          %v2603 = vmul.f32 %v2602, %v2601
          %v2604 = vmul.f32 0.5, %v2603
          %v2605 = vsub.f32 1.5, %v2604
          %v2606 = vmul.f32 %v2601, %v2605
          %vm2607 = vweird.f32 %v2590
          %vm2608 = vweird.f32 %v2601
          %vm2609 = vmor %vm2607, %vm2608
          %v2610 = vsel %vm2609, %v2601, %v2606
          %v2611 = vmul.f32 %v2577, %v2600
          %v2612 = vmul.f32 %v2578, %v2610
          %v2614 = vperm.slane %v2567, 0
          %v2616 = vmul.f32 %v2611, %v2614
          %v2617 = vmul.f32 %v2612, %v2614
          %v2619 = vperm.slane %v2568, 0
          %v2621 = vadd.f32 %v2616, %v2619
          %v2622 = vadd.f32 %v2617, %v2619
          %2623 = vst.msk [vmem:[#allocation3] sm:$0xff] %vm666, %v2621
          %2624 = vst.msk [vmem:[#allocation3 + $0x8] sm:$0xff] %vm666, %v2622
        $region84: #{tpu_custom_call.1} parent=75 // pred_fallthru
          _
        // Predicated region
        $region85: #{tpu_custom_call.1} parent=75 // pred_check
          %p2625 = pneg %p410
        $region86: #{tpu_custom_call.1} parent=75 // pred_check_branch
          %2627 = sbr.rel (%p2625) target = $region88
        $region87: #{tpu_custom_call.1} parent=75 // pred_region
          %s2628 = smul.u32 2, %s30
          %2630 = vsyncadd [#allocation4], 0
          %s2631 = smul.addr %s2628, 8
          %s2632 = scalar_lea.hbm %s14, %s2631
          %s2633 = sshll.u32 [#allocation3], 4
          %s2634 = int_to_ptr.vmem [resolvable:$true] %s2633
          %s2635 = sshll.u32 %s2632, 4
          %s2636 = int_to_ptr.hbm [resolvable:$true] %s2635
          %2641 = dma.vmem_to_hbm [thread:$0]  %s2634, 256, %s2636, [#allocation4], 128, 128, 8
        $region88: #{tpu_custom_call.1} parent=75 // pred_fallthru
          _
        // Predicated region
        $region89: #{tpu_custom_call.1} parent=75 // pred_check
          %p2642 = pneg %p410
        $region90: #{tpu_custom_call.1} parent=75 // pred_check_branch
          %2644 = sbr.rel (%p2642) target = $region92
        $region91: #{tpu_custom_call.1} parent=75 // pred_region
          %2646 = dma.done [#allocation4], 256
        $region92: #{tpu_custom_call.1} parent=75 // pred_fallthru
          _
      $region76: #{tpu_custom_call.1} parent=5 // pred_fallthru
        _
      %p2647 = scmp.le.s32.totalorder 2, %s21
      // Predicated region
      $region93: #{tpu_custom_call.1} parent=5 // pred_check
        %p2648 = pneg %p2647
      $region94: #{tpu_custom_call.1} parent=5 // pred_check_branch
        %2650 = sbr.rel (%p2648) target = $region96
      $region95: #{tpu_custom_call.1} parent=5 // pred_region
        %s2651 = ssub.s32 %s21, 2
      $region96: #{tpu_custom_call.1} parent=5 // pred_fallthru
        _
    $region6: #{tpu_custom_call.1} parent=1 // loop_footer
      %s25 = sadd.s32 1, %s21
    $region7: #{tpu_custom_call.1} parent=1 // loop_footer_branch
      %20 = sbr.rel target = $region3
    $region8: #{tpu_custom_call.1} parent=1 // loop_exit
      _
    %2652 = vsyncpa [#allocation4], 1
    %s2653 = scalar_lea.sflag [#allocation4], 1
    %2654 = vsyncpa %s2653, 1

</llo_original>
